<compile_context>
chip_gen: v6e
topology: v6e:2x2x1
jax: 0.10.0
libtpu: 0.0.40
codegen_flags: <defaults>
</compile_context>

<pallas_src>
import math
import functools

import jax
import jax.numpy as jnp
from jax.experimental import pallas as pl
from jax.experimental.pallas import tpu as pltpu


def _round_up(x, m):
    return (x + m - 1) // m * m


# ----------------------------------------------------------------------------
# Fused kernel: local_encoder + project_features + pos add + extra token +
#               pre-LN multi-head self-attention with in-kernel ALiBi + residual
# Grid: (B, H).  Per-batch work runs at h == 0 into VMEM scratch; each head
# reads its cached Q/K/V slab, computes attention and writes o_h; the last
# head concatenates all heads and applies Wo + residual.
# ----------------------------------------------------------------------------
def _fused_encoder_kernel(feat_ref, w_enc_ref, b_enc_ref, g1_ref, b1_ref,
                          pos_ref, extra_ref, g2_ref, b2_ref,
                          wqkv_ref, wo_ref, slope_ref,
                          local_ref, x_ref,
                          xfull_sc, qkv_sc, dist_sc, heads_sc,
                          *, num_extra, num_heads, head_dim, seq_len):
    h_idx = pl.program_id(1)
    S_pad, E = xfull_sc.shape
    S = seq_len                      # T + num_extra (may be < S_pad)
    hd = head_dim

    # ---------------- per-batch prologue (first head step only) --------------
    @pl.when(h_idx == 0)
    def _():
        # local_encoder: Linear (bf16 MXU operands, f32 accumulation)
        f = feat_ref[0]                                              # (T, Din) bf16
        y = jnp.dot(f, w_enc_ref[...],
                    preferred_element_type=jnp.float32) + b_enc_ref[...]
        # project_features: LayerNorm (f32 stats)
        mu = jnp.mean(y, axis=-1, keepdims=True)
        var = jnp.mean((y - mu) ** 2, axis=-1, keepdims=True)
        loc = (y - mu) * jax.lax.rsqrt(var + 1e-5) * g1_ref[...] + b1_ref[...]
        local_ref[0] = loc                                           # local_features

        # x = local_features + fixed positional encoding; prepend extra tokens;
        # zero the sublane-alignment pad rows so downstream math stays finite.
        xfull_sc[0:num_extra, :] = extra_ref[...]
        xfull_sc[num_extra:S, :] = loc + pos_ref[...]
        if S_pad > S:
            xfull_sc[S:S_pad, :] = jnp.zeros((S_pad - S, E), jnp.float32)

        # context-encoder pre-LN (f32 stats), cast to bf16 ONCE
        xf = xfull_sc[...]
        mu2 = jnp.mean(xf, axis=-1, keepdims=True)
        var2 = jnp.mean((xf - mu2) ** 2, axis=-1, keepdims=True)
        xn = (xf - mu2) * jax.lax.rsqrt(var2 + 1e-5) * g2_ref[...] + b2_ref[...]
        xn_b = xn.astype(jnp.bfloat16)

        # fused QKV: one lane-dense (S_pad, E) x (E, 3E) MXU matmul; the weight
        # columns are head-grouped [q_h | k_h | v_h], so the per-head cache is
        # filled with STATIC lane slices only.
        qkv = jnp.dot(xn_b, wqkv_ref[...],
                      preferred_element_type=jnp.float32).astype(jnp.bfloat16)
        for hh in range(num_heads):
            qkv_sc[hh] = qkv[:, hh * 3 * hd:(hh + 1) * 3 * hd]

        # ALiBi geometry hoisted out of the head loop: -|i-j| on body positions,
        # zero on extra-token rows/cols and on alignment-pad rows/cols.
        ii = jax.lax.broadcasted_iota(jnp.int32, (S_pad, S_pad), 0)
        jj = jax.lax.broadcasted_iota(jnp.int32, (S_pad, S_pad), 1)
        dist = -jnp.abs(ii - jj).astype(jnp.float32)
        body = jnp.logical_and(jnp.logical_and(ii >= num_extra, jj >= num_extra),
                               jnp.logical_and(ii < S, jj < S))
        dist_sc[...] = jnp.where(body, dist, 0.0)

    # ---------------- per-head attention (sequential "arbitrary" axis) -------
    blk = qkv_sc[h_idx]                            # (S_pad, 3*hd) bf16
    q = blk[:, 0:hd]
    k = blk[:, hd:2 * hd]
    v = blk[:, 2 * hd:3 * hd]

    scale = 1.0 / math.sqrt(hd)
    # scores = Q K^T / sqrt(hd); contract head dim directly (no explicit k.T)
    s = jax.lax.dot_general(q, k, (((1,), (1,)), ((), ())),
                            preferred_element_type=jnp.float32) * scale
    s = s + slope_ref[h_idx] * dist_sc[...]        # ALiBi (slope read from SMEM)
    if S_pad > S:                                  # mask alignment-pad key columns
        jj1 = jax.lax.broadcasted_iota(jnp.int32, (1, S_pad), 1)
        s = s + jnp.where(jj1 < S, 0.0, -1e30)

    # softmax in f32; denominator via approx reciprocal (EUP slot)
    m = jnp.max(s, axis=-1, keepdims=True)
    e = jnp.exp(s - m)
    l = jnp.sum(e, axis=-1, keepdims=True)
    p = e * pl.reciprocal(l, approx=True)

    o_h = jnp.dot(p.astype(jnp.bfloat16), v,
                  preferred_element_type=jnp.float32)                # (S_pad, hd)
    heads_sc[h_idx] = o_h.astype(jnp.bfloat16)

    # ---------------- per-batch epilogue (last head) --------------------------
    @pl.when(h_idx == num_heads - 1)
    def _():
        # one full-K output projection instead of per-head K=hd matmuls
        attn = jnp.concatenate([heads_sc[i] for i in range(num_heads)], axis=-1)
        proj = jnp.dot(attn, wo_ref[...], preferred_element_type=jnp.float32)
        # single unaligned (S, E) slice only here, on the final store
        x_ref[0] = xfull_sc[0:S, :] + proj[0:S, :]


def fused_encoder_forward(features_bf16, w_enc, b_enc, g1, b1, pos_sliced, extra,
                          g2, b2, wqkv, wo, slopes_scaled,
                          *, num_heads, num_extra):
    B, T, Din = features_bf16.shape
    E = w_enc.shape[1]
    hd = E // num_heads
    S = T + num_extra
    S_pad = _round_up(S, 8)          # sublane-aligned sequence axis for scratches

    kernel = functools.partial(_fused_encoder_kernel, num_extra=num_extra,
                               num_heads=num_heads, head_dim=hd, seq_len=S)

    out_shape = (jax.ShapeDtypeStruct((B, T, E), jnp.float32),   # local_features
                 jax.ShapeDtypeStruct((B, S, E), jnp.float32))   # x (with extra token)

    scratch_defs = [
        ((S_pad, E), jnp.float32),                    # x w/ extra token (pre-residual)
        ((num_heads, S_pad, 3 * hd), jnp.bfloat16),   # per-head [Q|K|V] cache
        ((S_pad, S_pad), jnp.float32),                # masked ALiBi distance
        ((num_heads, S_pad, hd), jnp.bfloat16),       # per-head attention outputs
    ]
    scratch_shapes = [pltpu.VMEM(shape, dt) for shape, dt in scratch_defs]

    in_specs = [
        pl.BlockSpec((1, T, Din), lambda b, h: (b, 0, 0)),      # features (bf16)
        pl.BlockSpec((Din, E), lambda b, h: (0, 0)),            # W_enc (resident)
        pl.BlockSpec((1, E), lambda b, h: (0, 0)),              # b_enc
        pl.BlockSpec((1, E), lambda b, h: (0, 0)),              # LN1 gamma
        pl.BlockSpec((1, E), lambda b, h: (0, 0)),              # LN1 beta
        pl.BlockSpec((T, E), lambda b, h: (0, 0)),              # pos[:T] (host-sliced)
        pl.BlockSpec((num_extra, E), lambda b, h: (0, 0)),      # extra tokens
        pl.BlockSpec((1, E), lambda b, h: (0, 0)),              # LN2 gamma
        pl.BlockSpec((1, E), lambda b, h: (0, 0)),              # LN2 beta
        pl.BlockSpec((E, 3 * E), lambda b, h: (0, 0)),          # fused Wqkv (resident)
        pl.BlockSpec((E, E), lambda b, h: (0, 0)),              # Wo (resident)
        pl.BlockSpec(memory_space=pltpu.MemorySpace.SMEM),      # scaled slopes (H,)
    ]
    out_specs = [
        pl.BlockSpec((1, T, E), lambda b, h: (b, 0, 0)),        # local_features
        pl.BlockSpec((1, S, E), lambda b, h: (b, 0, 0)),        # x
    ]

    # ---- VMEM budget: real footprint (tile-padded) + headroom, clamped to chip ----
    def _padded_bytes(shape, dtype):
        dims = list(shape)
        dims[-1] = _round_up(dims[-1], 128)
        if len(dims) >= 2:
            dims[-2] = _round_up(dims[-2], 8)
        n = 1
        for d in dims:
            n *= d
        return n * jnp.dtype(dtype).itemsize

    est = sum(_padded_bytes(shape, dt) for shape, dt in scratch_defs)
    io_blocks = [((T, Din), jnp.bfloat16), ((Din, E), jnp.bfloat16),
                 ((1, E), jnp.float32), ((1, E), jnp.float32), ((1, E), jnp.float32),
                 ((T, E), jnp.float32), ((num_extra, E), jnp.float32),
                 ((1, E), jnp.float32), ((1, E), jnp.float32),
                 ((E, 3 * E), jnp.bfloat16), ((E, E), jnp.bfloat16),
                 ((T, E), jnp.float32), ((S, E), jnp.float32)]
    est += 2 * sum(_padded_bytes(shape, dt) for shape, dt in io_blocks)  # double-buffered
    try:
        vmem_cap = pltpu.get_tpu_info().vmem_capacity_bytes
    except Exception:
        vmem_cap = 64 * 1024 * 1024          # conservative (v7x per-core VMEM)
    vmem_limit = int(min(max(est + (8 << 20), 24 << 20), int(vmem_cap * 0.9)))

    return pl.pallas_call(
        kernel,
        out_shape=out_shape,
        grid_spec=pltpu.PrefetchScalarGridSpec(
            num_scalar_prefetch=0,
            grid=(B, num_heads),
            in_specs=in_specs,
            out_specs=out_specs,
            scratch_shapes=scratch_shapes,
        ),
        compiler_params=pltpu.CompilerParams(
            # B is the "parallel" axis for v7x's two TensorCores (needs B >= 2);
            # heads are a sequential reduction-like axis over the shared scratch.
            dimension_semantics=("parallel", "arbitrary"),
            vmem_limit_bytes=vmem_limit),
    )(features_bf16, w_enc, b_enc, g1, b1, pos_sliced, extra, g2, b2,
      wqkv, wo, slopes_scaled)


# ----------------------------------------------------------------------------
# ALiBi slopes (exact reference recursion, host-side).
# ----------------------------------------------------------------------------
def _get_slopes(n):
    def power_of_2(n):
        start = 2 ** (-2 ** (-(math.log2(n) - 3)))
        return [start * start ** i for i in range(n)]
    if math.log2(n).is_integer():
        return power_of_2(n)
    closest = 2 ** math.floor(math.log2(n))
    return power_of_2(closest) + _get_slopes(2 * closest)[0::2][: n - closest]


# ----------------------------------------------------------------------------
# JAX-side ModalitySpecificEncoder
# ----------------------------------------------------------------------------
class ModalitySpecificEncoderJAX:
    def __init__(self, key, d_in, embed_dim, num_heads, max_len,
                 num_extra_tokens=1, alibi_scale=1.0):
        assert embed_dim % num_heads == 0
        E = embed_dim
        self.embed_dim = E
        self.num_heads = num_heads
        self.num_extra_tokens = num_extra_tokens
        hd = E // num_heads
        ks = jax.random.split(key, 8)

        # local_encoder (Linear, bf16 weights) + project_features (LayerNorm)
        self.w_enc = (jax.random.normal(ks[0], (d_in, E), jnp.float32)
                      * 0.02).astype(jnp.bfloat16)
        self.b_enc = jnp.zeros((1, E), jnp.float32)
        self.ln1_g = jnp.ones((1, E), jnp.float32)
        self.ln1_b = jnp.zeros((1, E), jnp.float32)
        # fixed positional encoder (learned table; forward() slices [:T] host-side)
        self.pos = jax.random.normal(ks[1], (max_len, E), jnp.float32) * 0.02
        # extra token (init_extra_token_zero=False -> normal init)
        self.extra_tokens = jax.random.normal(
            ks[2], (num_extra_tokens, E), jnp.float32)

        # context encoder: pre-LN MHA; Q/K/V fused into one (E, 3E) matrix with
        # head-grouped columns [q_h | k_h | v_h] per head.
        wq = jax.random.normal(ks[3], (E, E), jnp.float32) * 0.02
        wk = jax.random.normal(ks[4], (E, E), jnp.float32) * 0.02
        wv = jax.random.normal(ks[5], (E, E), jnp.float32) * 0.02
        self.wqkv = jnp.stack(
            [wq.reshape(E, num_heads, hd),
             wk.reshape(E, num_heads, hd),
             wv.reshape(E, num_heads, hd)], axis=2
        ).reshape(E, 3 * E).astype(jnp.bfloat16)
        self.wo = (jax.random.normal(ks[6], (E, E), jnp.float32)
                   * 0.02).astype(jnp.bfloat16)
        self.ln2_g = jnp.ones((1, E), jnp.float32)
        self.ln2_b = jnp.zeros((1, E), jnp.float32)

        # ALiBi: slopes + alibi_scale parameter (learned_alibi_scale=False)
        self.slopes = jnp.asarray(_get_slopes(num_heads), dtype=jnp.float32)  # (H,)
        self.alibi_scale = jnp.full((1, 1, 1, 1, 1), alibi_scale, jnp.float32)

    def _alibi_bias_out(self, B, T, scale):
        # Host-side (B, H, S, S) bias for the returned dict only; the kernel
        # regenerates the bias in-registers and never reads this tensor.
        num = self.num_extra_tokens
        idx = jnp.arange(T)
        dist = -jnp.abs(idx[None, :] - idx[:, None]).astype(jnp.float32)   # (T, T)
        bias = self.slopes[:, None, None] * dist[None] * scale             # (H, T, T)
        bias = jnp.pad(bias, ((0, 0), (num, 0), (num, 0)))
        S = T + num
        return jnp.broadcast_to(bias[None], (B, self.num_heads, S, S))

    def forward(self, features, padding_mask=None, mask=False, remove_masked=False,
                clone_batch=1):
        # TODO(synk): masking / remove_masked / clone_batch>1 paths need subclass
        # mask_info machinery (not defined in the base class) and are not modeled.
        B, T, _ = features.shape

        # alibi_scale.clamp_min(0); size(0) == 1 -> folded into bias, None downstream
        scale = jnp.maximum(self.alibi_scale, 0.0).reshape(())
        slopes_scaled = (self.slopes * scale).astype(jnp.float32)          # (H,)

        local_features, x = fused_encoder_forward(
            features.astype(jnp.bfloat16), self.w_enc, self.b_enc,
            self.ln1_g, self.ln1_b, self.pos[:T], self.extra_tokens,
            self.ln2_g, self.ln2_b, self.wqkv, self.wo, slopes_scaled,
            num_heads=self.num_heads, num_extra=self.num_extra_tokens)

        alibi_bias = self._alibi_bias_out(B, T, scale)

        return {
            "x": x,
            "local_features": local_features,
            "padding_mask": None,
            "alibi_bias": alibi_bias,
            "alibi_scale": None,
            "encoder_mask": None,
        }


if __name__ == "__main__":
    B, T, D_IN, E, H = 2, 8, 16, 32, 4

    key = jax.random.PRNGKey(0)
    k_params, k_feat = jax.random.split(key)
    enc = ModalitySpecificEncoderJAX(k_params, d_in=D_IN, embed_dim=E,
                                     num_heads=H, max_len=16)

    features = jax.random.normal(k_feat, (B, T, D_IN), jnp.float32)

    out = enc.forward(features, padding_mask=None, mask=False, remove_masked=False)
    jax.block_until_ready(out["x"])
    jax.block_until_ready(out["local_features"])
    jax.block_until_ready(out["alibi_bias"])

    assert out["x"].shape == (B, T + 1, E)
    assert out["local_features"].shape == (B, T, E)
    assert out["alibi_bias"].shape == (B, H, T + 1, T + 1)
    print("KERNEL_OK")
</pallas_src>

<mosaic_0001>
module attributes {stable_mosaic.version = 11 : i64} {
  func.func @_fused_encoder_kernel(%arg0: i32, %arg1: i32, %arg2: memref<1x8x16xbf16, #tpu.memory_space<vmem>>, %arg3: memref<16x32xbf16, #tpu.memory_space<vmem>>, %arg4: memref<1x32xf32, #tpu.memory_space<vmem>>, %arg5: memref<1x32xf32, #tpu.memory_space<vmem>>, %arg6: memref<1x32xf32, #tpu.memory_space<vmem>>, %arg7: memref<8x32xf32, #tpu.memory_space<vmem>>, %arg8: memref<1x32xf32, #tpu.memory_space<vmem>>, %arg9: memref<1x32xf32, #tpu.memory_space<vmem>>, %arg10: memref<1x32xf32, #tpu.memory_space<vmem>>, %arg11: memref<32x96xbf16, #tpu.memory_space<vmem>>, %arg12: memref<32x32xbf16, #tpu.memory_space<vmem>>, %arg13: memref<4xf32, #tpu.memory_space<smem>>, %arg14: memref<1x8x32xf32, #tpu.memory_space<vmem>>, %arg15: memref<1x9x32xf32, #tpu.memory_space<vmem>>, %arg16: memref<16x32xf32, #tpu.memory_space<vmem>>, %arg17: memref<4x16x24xbf16, #tpu.memory_space<vmem>>, %arg18: memref<16x16xf32, #tpu.memory_space<vmem>>, %arg19: memref<4x16x8xbf16, #tpu.memory_space<vmem>>) attributes {dimension_semantics = [#tpu.dimension_semantics<parallel>, #tpu.dimension_semantics<arbitrary>], iteration_bounds = array<i64: 2, 4>, scalar_prefetch = 0 : i64, scratch_operands = 4 : i64, tpu.core_type = #tpu.core_type<tc>, window_params = [{transform_indices = @transform_0, window_bounds = array<i64: 1, 8, 16>}, {pipeline_mode = #tpu.pipeline_mode<synchronous>, transform_indices = @transform_1, window_bounds = array<i64: 16, 32>}, {pipeline_mode = #tpu.pipeline_mode<synchronous>, transform_indices = @transform_2, window_bounds = array<i64: 1, 32>}, {pipeline_mode = #tpu.pipeline_mode<synchronous>, transform_indices = @transform_3, window_bounds = array<i64: 1, 32>}, {pipeline_mode = #tpu.pipeline_mode<synchronous>, transform_indices = @transform_4, window_bounds = array<i64: 1, 32>}, {pipeline_mode = #tpu.pipeline_mode<synchronous>, transform_indices = @transform_5, window_bounds = array<i64: 8, 32>}, {pipeline_mode = #tpu.pipeline_mode<synchronous>, transform_indices = @transform_6, window_bounds = array<i64: 1, 32>}, {pipeline_mode = #tpu.pipeline_mode<synchronous>, transform_indices = @transform_7, window_bounds = array<i64: 1, 32>}, {pipeline_mode = #tpu.pipeline_mode<synchronous>, transform_indices = @transform_8, window_bounds = array<i64: 1, 32>}, {pipeline_mode = #tpu.pipeline_mode<synchronous>, transform_indices = @transform_9, window_bounds = array<i64: 32, 96>}, {pipeline_mode = #tpu.pipeline_mode<synchronous>, transform_indices = @transform_10, window_bounds = array<i64: 32, 32>}, {transform_indices = @transform_11, window_bounds = array<i64: 4>}, {transform_indices = @transform_12, window_bounds = array<i64: 1, 8, 32>}, {transform_indices = @transform_13, window_bounds = array<i64: 1, 9, 32>}]} {
    %c0_i32 = arith.constant 0 : i32
    %0 = arith.cmpi eq, %arg1, %c0_i32 : i32
    %1 = arith.extui %0 : i1 to i32
    %c0_i32_0 = arith.constant 0 : i32
    %2 = arith.cmpi ne, %1, %c0_i32_0 : i32
    scf.if %2 {
      %c0_13 = arith.constant 0 : index
      %c0_14 = arith.constant 0 : index
      %c0_15 = arith.constant 0 : index
      %46 = vector.load %arg2[%c0_13, %c0_14, %c0_15] : memref<1x8x16xbf16, #tpu.memory_space<vmem>>, vector<1x8x16xbf16>
      %47 = vector.shape_cast %46 : vector<1x8x16xbf16> to vector<8x16xbf16>
      %c0_16 = arith.constant 0 : index
      %c0_17 = arith.constant 0 : index
      %48 = vector.load %arg3[%c0_16, %c0_17] : memref<16x32xbf16, #tpu.memory_space<vmem>>, vector<16x32xbf16>
      %cst_18 = arith.constant dense<0.000000e+00> : vector<8x32xf32>
      %49 = tpu.matmul %47, %48, %cst_18 {dimension_numbers = #tpu.dot_dimension_numbers<[1], [0], [0], [1], [0, 0, 1, 1], [], []>} : vector<8x16xbf16>, vector<16x32xbf16>, vector<8x32xf32> -> vector<8x32xf32>
      %c0_19 = arith.constant 0 : index
      %c0_20 = arith.constant 0 : index
      %50 = vector.load %arg4[%c0_19, %c0_20] : memref<1x32xf32, #tpu.memory_space<vmem>>, vector<1x32xf32>
      %51 = vector.broadcast %50 : vector<1x32xf32> to vector<8x32xf32>
      %52 = arith.addf %49, %51 : vector<8x32xf32>
      %cst_21 = arith.constant dense<0.000000e+00> : vector<8xf32>
      %53 = vector.multi_reduction <add>, %52, %cst_21 [1] : vector<8x32xf32> to vector<8xf32>
      %54 = vector.shape_cast %53 : vector<8xf32> to vector<8x1xf32>
      %cst_22 = arith.constant 3.200000e+01 : f32
      %55 = vector.broadcast %cst_22 : f32 to vector<8x1xf32>
      %56 = arith.divf %54, %55 : vector<8x1xf32>
      %57 = vector.broadcast %56 : vector<8x1xf32> to vector<8x32xf32>
      %58 = arith.subf %52, %57 : vector<8x32xf32>
      %59 = arith.mulf %58, %58 : vector<8x32xf32>
      %cst_23 = arith.constant dense<0.000000e+00> : vector<8xf32>
      %60 = vector.multi_reduction <add>, %59, %cst_23 [1] : vector<8x32xf32> to vector<8xf32>
      %61 = vector.shape_cast %60 : vector<8xf32> to vector<8x1xf32>
      %cst_24 = arith.constant 3.200000e+01 : f32
      %62 = vector.broadcast %cst_24 : f32 to vector<8x1xf32>
      %63 = arith.divf %61, %62 : vector<8x1xf32>
      %64 = vector.broadcast %56 : vector<8x1xf32> to vector<8x32xf32>
      %65 = arith.subf %52, %64 : vector<8x32xf32>
      %cst_25 = arith.constant 9.99999974E-6 : f32
      %66 = vector.broadcast %cst_25 : f32 to vector<8x1xf32>
      %67 = arith.addf %63, %66 : vector<8x1xf32>
      %68 = math.rsqrt %67 : vector<8x1xf32>
      %69 = vector.broadcast %68 : vector<8x1xf32> to vector<8x32xf32>
      %70 = arith.mulf %65, %69 : vector<8x32xf32>
      %c0_26 = arith.constant 0 : index
      %c0_27 = arith.constant 0 : index
      %71 = vector.load %arg5[%c0_26, %c0_27] : memref<1x32xf32, #tpu.memory_space<vmem>>, vector<1x32xf32>
      %72 = vector.broadcast %71 : vector<1x32xf32> to vector<8x32xf32>
      %73 = arith.mulf %70, %72 : vector<8x32xf32>
      %c0_28 = arith.constant 0 : index
      %c0_29 = arith.constant 0 : index
      %74 = vector.load %arg6[%c0_28, %c0_29] : memref<1x32xf32, #tpu.memory_space<vmem>>, vector<1x32xf32>
      %75 = vector.broadcast %74 : vector<1x32xf32> to vector<8x32xf32>
      %76 = arith.addf %73, %75 : vector<8x32xf32>
      %c0_30 = arith.constant 0 : index
      %c0_31 = arith.constant 0 : index
      %c0_32 = arith.constant 0 : index
      %77 = vector.load %arg14[%c0_30, %c0_31, %c0_32] : memref<1x8x32xf32, #tpu.memory_space<vmem>>, vector<1x8x32xf32>
      %78 = vector.shape_cast %77 : vector<1x8x32xf32> to vector<8x32xf32>
      %79 = vector.shape_cast %76 : vector<8x32xf32> to vector<1x8x32xf32>
      tpu.vector_store %arg14[%c0_30, %c0_31, %c0_32], %79 {strides = array<i32>} : memref<1x8x32xf32, #tpu.memory_space<vmem>>, vector<1x8x32xf32>,
      %c0_33 = arith.constant 0 : index
      %c0_34 = arith.constant 0 : index
      %80 = vector.load %arg8[%c0_33, %c0_34] : memref<1x32xf32, #tpu.memory_space<vmem>>, vector<1x32xf32>
      %c0_35 = arith.constant 0 : index
      %c0_36 = arith.constant 0 : index
      %81 = vector.load %arg16[%c0_35, %c0_36] : memref<16x32xf32, #tpu.memory_space<vmem>>, vector<1x32xf32>
      tpu.vector_store %arg16[%c0_35, %c0_36], %80 {strides = array<i32>} : memref<16x32xf32, #tpu.memory_space<vmem>>, vector<1x32xf32>,
      %c0_37 = arith.constant 0 : index
      %c0_38 = arith.constant 0 : index
      %82 = vector.load %arg7[%c0_37, %c0_38] : memref<8x32xf32, #tpu.memory_space<vmem>>, vector<8x32xf32>
      %83 = arith.addf %76, %82 : vector<8x32xf32>
      %c1 = arith.constant 1 : index
      %c0_39 = arith.constant 0 : index
      %84 = vector.load %arg16[%c1, %c0_39] : memref<16x32xf32, #tpu.memory_space<vmem>>, vector<8x32xf32>
      tpu.vector_store %arg16[%c1, %c0_39], %83 {strides = array<i32>} : memref<16x32xf32, #tpu.memory_space<vmem>>, vector<8x32xf32>,
      %cst_40 = arith.constant 0.000000e+00 : f32
      %85 = vector.broadcast %cst_40 : f32 to vector<7x32xf32>
      %c9 = arith.constant 9 : index
      %c0_41 = arith.constant 0 : index
      %86 = vector.load %arg16[%c9, %c0_41] : memref<16x32xf32, #tpu.memory_space<vmem>>, vector<7x32xf32>
      tpu.vector_store %arg16[%c9, %c0_41], %85 {strides = array<i32>} : memref<16x32xf32, #tpu.memory_space<vmem>>, vector<7x32xf32>,
      %c0_42 = arith.constant 0 : index
      %c0_43 = arith.constant 0 : index
      %87 = vector.load %arg16[%c0_42, %c0_43] : memref<16x32xf32, #tpu.memory_space<vmem>>, vector<16x32xf32>
      %cst_44 = arith.constant dense<0.000000e+00> : vector<16xf32>
      %88 = vector.multi_reduction <add>, %87, %cst_44 [1] : vector<16x32xf32> to vector<16xf32>
      %89 = vector.shape_cast %88 : vector<16xf32> to vector<16x1xf32>
      %cst_45 = arith.constant 3.200000e+01 : f32
      %90 = vector.broadcast %cst_45 : f32 to vector<16x1xf32>
      %91 = arith.divf %89, %90 : vector<16x1xf32>
      %92 = vector.broadcast %91 : vector<16x1xf32> to vector<16x32xf32>
      %93 = arith.subf %87, %92 : vector<16x32xf32>
      %94 = arith.mulf %93, %93 : vector<16x32xf32>
      %cst_46 = arith.constant dense<0.000000e+00> : vector<16xf32>
      %95 = vector.multi_reduction <add>, %94, %cst_46 [1] : vector<16x32xf32> to vector<16xf32>
      %96 = vector.shape_cast %95 : vector<16xf32> to vector<16x1xf32>
      %cst_47 = arith.constant 3.200000e+01 : f32
      %97 = vector.broadcast %cst_47 : f32 to vector<16x1xf32>
      %98 = arith.divf %96, %97 : vector<16x1xf32>
      %99 = vector.broadcast %91 : vector<16x1xf32> to vector<16x32xf32>
      %100 = arith.subf %87, %99 : vector<16x32xf32>
      %cst_48 = arith.constant 9.99999974E-6 : f32
      %101 = vector.broadcast %cst_48 : f32 to vector<16x1xf32>
      %102 = arith.addf %98, %101 : vector<16x1xf32>
      %103 = math.rsqrt %102 : vector<16x1xf32>
      %104 = vector.broadcast %103 : vector<16x1xf32> to vector<16x32xf32>
      %105 = arith.mulf %100, %104 : vector<16x32xf32>
      %c0_49 = arith.constant 0 : index
      %c0_50 = arith.constant 0 : index
      %106 = vector.load %arg9[%c0_49, %c0_50] : memref<1x32xf32, #tpu.memory_space<vmem>>, vector<1x32xf32>
      %107 = vector.broadcast %106 : vector<1x32xf32> to vector<16x32xf32>
      %108 = arith.mulf %105, %107 : vector<16x32xf32>
      %c0_51 = arith.constant 0 : index
      %c0_52 = arith.constant 0 : index
      %109 = vector.load %arg10[%c0_51, %c0_52] : memref<1x32xf32, #tpu.memory_space<vmem>>, vector<1x32xf32>
      %110 = vector.broadcast %109 : vector<1x32xf32> to vector<16x32xf32>
      %111 = arith.addf %108, %110 : vector<16x32xf32>
      %112 = arith.truncf %111 : vector<16x32xf32> to vector<16x32xbf16>
      %c0_53 = arith.constant 0 : index
      %c0_54 = arith.constant 0 : index
      %113 = vector.load %arg11[%c0_53, %c0_54] : memref<32x96xbf16, #tpu.memory_space<vmem>>, vector<32x96xbf16>
      %cst_55 = arith.constant dense<0.000000e+00> : vector<16x96xf32>
      %114 = tpu.matmul %112, %113, %cst_55 {dimension_numbers = #tpu.dot_dimension_numbers<[1], [0], [0], [1], [0, 0, 1, 1], [], []>} : vector<16x32xbf16>, vector<32x96xbf16>, vector<16x96xf32> -> vector<16x96xf32>
      %115 = arith.truncf %114 : vector<16x96xf32> to vector<16x96xbf16>
      %116 = vector.extract_strided_slice %115 {offsets = [0, 0], sizes = [16, 24], strides = [1, 1]} : vector<16x96xbf16> to vector<16x24xbf16>
      %c0_56 = arith.constant 0 : index
      %c0_57 = arith.constant 0 : index
      %c0_58 = arith.constant 0 : index
      %117 = vector.load %arg17[%c0_56, %c0_57, %c0_58] : memref<4x16x24xbf16, #tpu.memory_space<vmem>>, vector<1x16x24xbf16>
      %118 = vector.shape_cast %117 : vector<1x16x24xbf16> to vector<16x24xbf16>
      %119 = vector.shape_cast %116 : vector<16x24xbf16> to vector<1x16x24xbf16>
      tpu.vector_store %arg17[%c0_56, %c0_57, %c0_58], %119 {strides = array<i32>} : memref<4x16x24xbf16, #tpu.memory_space<vmem>>, vector<1x16x24xbf16>,
      %120 = vector.extract_strided_slice %115 {offsets = [0, 24], sizes = [16, 24], strides = [1, 1]} : vector<16x96xbf16> to vector<16x24xbf16>
      %c1_59 = arith.constant 1 : index
      %c0_60 = arith.constant 0 : index
      %c0_61 = arith.constant 0 : index
      %121 = vector.load %arg17[%c1_59, %c0_60, %c0_61] : memref<4x16x24xbf16, #tpu.memory_space<vmem>>, vector<1x16x24xbf16>
      %122 = vector.shape_cast %121 : vector<1x16x24xbf16> to vector<16x24xbf16>
      %123 = vector.shape_cast %120 : vector<16x24xbf16> to vector<1x16x24xbf16>
      tpu.vector_store %arg17[%c1_59, %c0_60, %c0_61], %123 {strides = array<i32>} : memref<4x16x24xbf16, #tpu.memory_space<vmem>>, vector<1x16x24xbf16>,
      %124 = vector.extract_strided_slice %115 {offsets = [0, 48], sizes = [16, 24], strides = [1, 1]} : vector<16x96xbf16> to vector<16x24xbf16>
      %c2 = arith.constant 2 : index
      %c0_62 = arith.constant 0 : index
      %c0_63 = arith.constant 0 : index
      %125 = vector.load %arg17[%c2, %c0_62, %c0_63] : memref<4x16x24xbf16, #tpu.memory_space<vmem>>, vector<1x16x24xbf16>
      %126 = vector.shape_cast %125 : vector<1x16x24xbf16> to vector<16x24xbf16>
      %127 = vector.shape_cast %124 : vector<16x24xbf16> to vector<1x16x24xbf16>
      tpu.vector_store %arg17[%c2, %c0_62, %c0_63], %127 {strides = array<i32>} : memref<4x16x24xbf16, #tpu.memory_space<vmem>>, vector<1x16x24xbf16>,
      %128 = vector.extract_strided_slice %115 {offsets = [0, 72], sizes = [16, 24], strides = [1, 1]} : vector<16x96xbf16> to vector<16x24xbf16>
      %c3 = arith.constant 3 : index
      %c0_64 = arith.constant 0 : index
      %c0_65 = arith.constant 0 : index
      %129 = vector.load %arg17[%c3, %c0_64, %c0_65] : memref<4x16x24xbf16, #tpu.memory_space<vmem>>, vector<1x16x24xbf16>
      %130 = vector.shape_cast %129 : vector<1x16x24xbf16> to vector<16x24xbf16>
      %131 = vector.shape_cast %128 : vector<16x24xbf16> to vector<1x16x24xbf16>
      tpu.vector_store %arg17[%c3, %c0_64, %c0_65], %131 {strides = array<i32>} : memref<4x16x24xbf16, #tpu.memory_space<vmem>>, vector<1x16x24xbf16>,
      %132 = tpu.iota {dimensions = array<i32: 0>} : vector<16x16xi32>
      %133 = tpu.iota {dimensions = array<i32: 1>} : vector<16x16xi32>
      %134 = arith.subi %132, %133 : vector<16x16xi32>
      %135 = math.absi %134 : vector<16x16xi32>
      %136 = arith.sitofp %135 : vector<16x16xi32> to vector<16x16xf32>
      %cst_66 = arith.constant 0.000000e+00 : f32
      %137 = vector.broadcast %cst_66 : f32 to vector<16x16xf32>
      %138 = arith.subf %137, %136 : vector<16x16xf32>
      %c1_i32 = arith.constant 1 : i32
      %139 = vector.broadcast %c1_i32 : i32 to vector<16x16xi32>
      %140 = arith.cmpi sge, %132, %139 : vector<16x16xi32>
      %c1_i32_67 = arith.constant 1 : i32
      %141 = vector.broadcast %c1_i32_67 : i32 to vector<16x16xi32>
      %142 = arith.cmpi sge, %133, %141 : vector<16x16xi32>
      %143 = arith.andi %140, %142 : vector<16x16xi1>
      %c9_i32_68 = arith.constant 9 : i32
      %144 = vector.broadcast %c9_i32_68 : i32 to vector<16x16xi32>
      %145 = arith.cmpi slt, %132, %144 : vector<16x16xi32>
      %c9_i32_69 = arith.constant 9 : i32
      %146 = vector.broadcast %c9_i32_69 : i32 to vector<16x16xi32>
      %147 = arith.cmpi slt, %133, %146 : vector<16x16xi32>
      %148 = arith.andi %145, %147 : vector<16x16xi1>
      %149 = arith.andi %143, %148 : vector<16x16xi1>
      %cst_70 = arith.constant 0.000000e+00 : f32
      %150 = vector.broadcast %cst_70 : f32 to vector<16x16xf32>
      %151 = arith.select %149, %138, %150 : vector<16x16xi1>, vector<16x16xf32>
      %c0_71 = arith.constant 0 : index
      %c0_72 = arith.constant 0 : index
      %152 = vector.load %arg18[%c0_71, %c0_72] : memref<16x16xf32, #tpu.memory_space<vmem>>, vector<16x16xf32>
      tpu.vector_store %arg18[%c0_71, %c0_72], %151 {strides = array<i32>} : memref<16x16xf32, #tpu.memory_space<vmem>>, vector<16x16xf32>,
    } else {
    }
    %3 = arith.index_cast %arg1 : i32 to index
    %c0 = arith.constant 0 : index
    %c0_1 = arith.constant 0 : index
    %4 = vector.load %arg17[%3, %c0, %c0_1] : memref<4x16x24xbf16, #tpu.memory_space<vmem>>, vector<1x16x24xbf16>
    %5 = vector.shape_cast %4 : vector<1x16x24xbf16> to vector<16x24xbf16>
    %6 = vector.extract_strided_slice %5 {offsets = [0, 0], sizes = [16, 8], strides = [1, 1]} : vector<16x24xbf16> to vector<16x8xbf16>
    %7 = vector.extract_strided_slice %5 {offsets = [0, 8], sizes = [16, 8], strides = [1, 1]} : vector<16x24xbf16> to vector<16x8xbf16>
    %8 = vector.extract_strided_slice %5 {offsets = [0, 16], sizes = [16, 8], strides = [1, 1]} : vector<16x24xbf16> to vector<16x8xbf16>
    %cst = arith.constant dense<0.000000e+00> : vector<16x16xf32>
    %9 = tpu.matmul %6, %7, %cst {dimension_numbers = #tpu.dot_dimension_numbers<[1], [1], [0], [0], [0, 0, 1, 0], [], []>} : vector<16x8xbf16>, vector<16x8xbf16>, vector<16x16xf32> -> vector<16x16xf32>
    %cst_2 = arith.constant 0.353553385 : f32
    %10 = vector.broadcast %cst_2 : f32 to vector<16x16xf32>
    %11 = arith.mulf %9, %10 : vector<16x16xf32>
    %12 = arith.index_cast %arg1 : i32 to index
    %13 = memref.load %arg13[%12] : memref<4xf32, #tpu.memory_space<smem>>
    %c0_3 = arith.constant 0 : index
    %c0_4 = arith.constant 0 : index
    %14 = vector.load %arg18[%c0_3, %c0_4] : memref<16x16xf32, #tpu.memory_space<vmem>>, vector<16x16xf32>
    %15 = vector.broadcast %13 : f32 to vector<16x16xf32>
    %16 = arith.mulf %15, %14 : vector<16x16xf32>
    %17 = arith.addf %11, %16 : vector<16x16xf32>
    %18 = tpu.iota {dimensions = array<i32: 1>} : vector<1x16xi32>
    %c9_i32 = arith.constant 9 : i32
    %19 = vector.broadcast %c9_i32 : i32 to vector<1x16xi32>
    %20 = arith.cmpi slt, %18, %19 : vector<1x16xi32>
    %cst_5 = arith.constant 0.000000e+00 : f32
    %cst_6 = arith.constant -1.000000e+30 : f32
    %21 = vector.broadcast %cst_5 : f32 to vector<1x16xf32>
    %22 = vector.broadcast %cst_6 : f32 to vector<1x16xf32>
    %23 = arith.select %20, %21, %22 : vector<1x16xi1>, vector<1x16xf32>
    %24 = vector.broadcast %23 : vector<1x16xf32> to vector<16x16xf32>
    %25 = arith.addf %17, %24 : vector<16x16xf32>
    %cst_7 = arith.constant dense<0xFF800000> : vector<16xf32>
    %26 = vector.multi_reduction <maximumf>, %25, %cst_7 [1] : vector<16x16xf32> to vector<16xf32>
    %27 = vector.shape_cast %26 : vector<16xf32> to vector<16x1xf32>
    %28 = vector.broadcast %27 : vector<16x1xf32> to vector<16x16xf32>
    %29 = arith.subf %25, %28 : vector<16x16xf32>
    %30 = math.exp %29 : vector<16x16xf32>
    %cst_8 = arith.constant dense<0.000000e+00> : vector<16xf32>
    %31 = vector.multi_reduction <add>, %30, %cst_8 [1] : vector<16x16xf32> to vector<16xf32>
    %32 = vector.shape_cast %31 : vector<16xf32> to vector<16x1xf32>
    %33 = tpu.reciprocal %32 {approx = true} : vector<16x1xf32> -> vector<16x1xf32>
    %34 = vector.broadcast %33 : vector<16x1xf32> to vector<16x16xf32>
    %35 = arith.mulf %30, %34 : vector<16x16xf32>
    %36 = arith.truncf %35 : vector<16x16xf32> to vector<16x16xbf16>
    %cst_9 = arith.constant dense<0.000000e+00> : vector<16x8xf32>
    %37 = tpu.matmul %36, %8, %cst_9 {dimension_numbers = #tpu.dot_dimension_numbers<[1], [0], [0], [1], [0, 0, 1, 1], [], []>} : vector<16x16xbf16>, vector<16x8xbf16>, vector<16x8xf32> -> vector<16x8xf32>
    %38 = arith.truncf %37 : vector<16x8xf32> to vector<16x8xbf16>
    %39 = arith.index_cast %arg1 : i32 to index
    %c0_10 = arith.constant 0 : index
    %c0_11 = arith.constant 0 : index
    %40 = vector.load %arg19[%39, %c0_10, %c0_11] : memref<4x16x8xbf16, #tpu.memory_space<vmem>>, vector<1x16x8xbf16>
    %41 = vector.shape_cast %40 : vector<1x16x8xbf16> to vector<16x8xbf16>
    %42 = vector.shape_cast %38 : vector<16x8xbf16> to vector<1x16x8xbf16>
    tpu.vector_store %arg19[%39, %c0_10, %c0_11], %42 {strides = array<i32>} : memref<4x16x8xbf16, #tpu.memory_space<vmem>>, vector<1x16x8xbf16>,
    %c3_i32 = arith.constant 3 : i32
    %43 = arith.cmpi eq, %arg1, %c3_i32 : i32
    %44 = arith.extui %43 : i1 to i32
    %c0_i32_12 = arith.constant 0 : i32
    %45 = arith.cmpi ne, %44, %c0_i32_12 : i32
    scf.if %45 {
      %c0_13 = arith.constant 0 : index
      %c0_14 = arith.constant 0 : index
      %c0_15 = arith.constant 0 : index
      %46 = vector.load %arg19[%c0_13, %c0_14, %c0_15] : memref<4x16x8xbf16, #tpu.memory_space<vmem>>, vector<1x16x8xbf16>
      %47 = vector.shape_cast %46 : vector<1x16x8xbf16> to vector<16x8xbf16>
      %c1 = arith.constant 1 : index
      %c0_16 = arith.constant 0 : index
      %c0_17 = arith.constant 0 : index
      %48 = vector.load %arg19[%c1, %c0_16, %c0_17] : memref<4x16x8xbf16, #tpu.memory_space<vmem>>, vector<1x16x8xbf16>
      %49 = vector.shape_cast %48 : vector<1x16x8xbf16> to vector<16x8xbf16>
      %c2 = arith.constant 2 : index
      %c0_18 = arith.constant 0 : index
      %c0_19 = arith.constant 0 : index
      %50 = vector.load %arg19[%c2, %c0_18, %c0_19] : memref<4x16x8xbf16, #tpu.memory_space<vmem>>, vector<1x16x8xbf16>
      %51 = vector.shape_cast %50 : vector<1x16x8xbf16> to vector<16x8xbf16>
      %c3 = arith.constant 3 : index
      %c0_20 = arith.constant 0 : index
      %c0_21 = arith.constant 0 : index
      %52 = vector.load %arg19[%c3, %c0_20, %c0_21] : memref<4x16x8xbf16, #tpu.memory_space<vmem>>, vector<1x16x8xbf16>
      %53 = vector.shape_cast %52 : vector<1x16x8xbf16> to vector<16x8xbf16>
      %54 = tpu.concatenate %47, %49, %51, %53 in 1 : vector<16x8xbf16>, vector<16x8xbf16>, vector<16x8xbf16>, vector<16x8xbf16> -> vector<16x32xbf16>
      %c0_22 = arith.constant 0 : index
      %c0_23 = arith.constant 0 : index
      %55 = vector.load %arg12[%c0_22, %c0_23] : memref<32x32xbf16, #tpu.memory_space<vmem>>, vector<32x32xbf16>
      %cst_24 = arith.constant dense<0.000000e+00> : vector<16x32xf32>
      %56 = tpu.matmul %54, %55, %cst_24 {dimension_numbers = #tpu.dot_dimension_numbers<[1], [0], [0], [1], [0, 0, 1, 1], [], []>} : vector<16x32xbf16>, vector<32x32xbf16>, vector<16x32xf32> -> vector<16x32xf32>
      %c0_25 = arith.constant 0 : index
      %c0_26 = arith.constant 0 : index
      %57 = vector.load %arg16[%c0_25, %c0_26] : memref<16x32xf32, #tpu.memory_space<vmem>>, vector<9x32xf32>
      %58 = vector.extract_strided_slice %56 {offsets = [0, 0], sizes = [9, 32], strides = [1, 1]} : vector<16x32xf32> to vector<9x32xf32>
      %59 = arith.addf %57, %58 : vector<9x32xf32>
      %c0_27 = arith.constant 0 : index
      %c0_28 = arith.constant 0 : index
      %c0_29 = arith.constant 0 : index
      %60 = vector.load %arg15[%c0_27, %c0_28, %c0_29] : memref<1x9x32xf32, #tpu.memory_space<vmem>>, vector<1x9x32xf32>
      %61 = vector.shape_cast %60 : vector<1x9x32xf32> to vector<9x32xf32>
      %62 = vector.shape_cast %59 : vector<9x32xf32> to vector<1x9x32xf32>
      tpu.vector_store %arg15[%c0_27, %c0_28, %c0_29], %62 {strides = array<i32>} : memref<1x9x32xf32, #tpu.memory_space<vmem>>, vector<1x9x32xf32>,
    } else {
    }
    return
  }
  func.func @transform_0(%arg0: i32, %arg1: i32) -> (i32, i32, i32) {
    %c0_i32 = arith.constant 0 : i32
    %c0_i32_0 = arith.constant 0 : i32
    %c0_i32_1 = arith.constant 0 : i32
    return %arg0, %c0_i32, %c0_i32_0 : i32, i32, i32
  }
  func.func @transform_1(%arg0: i32, %arg1: i32) -> (i32, i32) {
    %c0_i32 = arith.constant 0 : i32
    %c0_i32_0 = arith.constant 0 : i32
    %c0_i32_1 = arith.constant 0 : i32
    return %c0_i32, %c0_i32_0 : i32, i32
  }
  func.func @transform_2(%arg0: i32, %arg1: i32) -> (i32, i32) {
    %c0_i32 = arith.constant 0 : i32
    %c0_i32_0 = arith.constant 0 : i32
    %c0_i32_1 = arith.constant 0 : i32
    return %c0_i32, %c0_i32_0 : i32, i32
  }
  func.func @transform_3(%arg0: i32, %arg1: i32) -> (i32, i32) {
    %c0_i32 = arith.constant 0 : i32
    %c0_i32_0 = arith.constant 0 : i32
    %c0_i32_1 = arith.constant 0 : i32
    return %c0_i32, %c0_i32_0 : i32, i32
  }
  func.func @transform_4(%arg0: i32, %arg1: i32) -> (i32, i32) {
    %c0_i32 = arith.constant 0 : i32
    %c0_i32_0 = arith.constant 0 : i32
    %c0_i32_1 = arith.constant 0 : i32
    return %c0_i32, %c0_i32_0 : i32, i32
  }
  func.func @transform_5(%arg0: i32, %arg1: i32) -> (i32, i32) {
    %c0_i32 = arith.constant 0 : i32
    %c0_i32_0 = arith.constant 0 : i32
    %c0_i32_1 = arith.constant 0 : i32
    return %c0_i32, %c0_i32_0 : i32, i32
  }
  func.func @transform_6(%arg0: i32, %arg1: i32) -> (i32, i32) {
    %c0_i32 = arith.constant 0 : i32
    %c0_i32_0 = arith.constant 0 : i32
    %c0_i32_1 = arith.constant 0 : i32
    return %c0_i32, %c0_i32_0 : i32, i32
  }
  func.func @transform_7(%arg0: i32, %arg1: i32) -> (i32, i32) {
    %c0_i32 = arith.constant 0 : i32
    %c0_i32_0 = arith.constant 0 : i32
    %c0_i32_1 = arith.constant 0 : i32
    return %c0_i32, %c0_i32_0 : i32, i32
  }
  func.func @transform_8(%arg0: i32, %arg1: i32) -> (i32, i32) {
    %c0_i32 = arith.constant 0 : i32
    %c0_i32_0 = arith.constant 0 : i32
    %c0_i32_1 = arith.constant 0 : i32
    return %c0_i32, %c0_i32_0 : i32, i32
  }
  func.func @transform_9(%arg0: i32, %arg1: i32) -> (i32, i32) {
    %c0_i32 = arith.constant 0 : i32
    %c0_i32_0 = arith.constant 0 : i32
    %c0_i32_1 = arith.constant 0 : i32
    return %c0_i32, %c0_i32_0 : i32, i32
  }
  func.func @transform_10(%arg0: i32, %arg1: i32) -> (i32, i32) {
    %c0_i32 = arith.constant 0 : i32
    %c0_i32_0 = arith.constant 0 : i32
    %c0_i32_1 = arith.constant 0 : i32
    return %c0_i32, %c0_i32_0 : i32, i32
  }
  func.func @transform_11(%arg0: i32, %arg1: i32) -> i32 {
    %c0_i32 = arith.constant 0 : i32
    %c0_i32_0 = arith.constant 0 : i32
    return %c0_i32 : i32
  }
  func.func @transform_12(%arg0: i32, %arg1: i32) -> (i32, i32, i32) {
    %c0_i32 = arith.constant 0 : i32
    %c0_i32_0 = arith.constant 0 : i32
    %c0_i32_1 = arith.constant 0 : i32
    return %arg0, %c0_i32, %c0_i32_0 : i32, i32, i32
  }
  func.func @transform_13(%arg0: i32, %arg1: i32) -> (i32, i32, i32) {
    %c0_i32 = arith.constant 0 : i32
    %c0_i32_0 = arith.constant 0 : i32
    %c0_i32_1 = arith.constant 0 : i32
    return %arg0, %c0_i32, %c0_i32_0 : i32, i32, i32
  }
}

</mosaic_0001>

<llo_original>
// kernel: tpu_custom_call.1
$region0: #{tpu_custom_call.1}
  #allocation0 [shape = 'u32[]', space=smem, size = 0x4, offset = 0x4, fixed_abs, tag = 'smem constant byte address 0x4 - core index']
  #allocation1 [shape = 'u32[144,128]{1,0:T(1,128)}', space=vmem, size = 0x12000, scoped, tag = 'internal scratch']
  #allocation2 [shape = 'f32[16,32]{1,0:T(8,128)}', space=vmem, size = 0x2000, scoped, tag = 'scratch operand']
  #allocation3 [shape = 'bf16[4,16,24]{2,1,0:T(8,128)(2,1)}', space=vmem, size = 0x4000, scoped, tag = 'scratch operand']
  #allocation4 [shape = 'f32[16,16]{1,0:T(8,128)}', space=vmem, size = 0x2000, scoped, tag = 'scratch operand']
  #allocation5 [shape = 'bf16[4,16,8]{2,1,0:T(8,128)(2,1)}', space=vmem, size = 0x4000, scoped, tag = 'scratch operand']
  %s0 = inlined_call_operand.hbm [shape: bf16[2,8,16], index: 0, kind: input, shape index: {}]
  %s1 = inlined_call_operand.hbm [shape: bf16[16,32], index: 1, kind: input, shape index: {}]
  %s2 = inlined_call_operand.hbm [shape: f32[1,32], index: 2, kind: input, shape index: {}]
  %s3 = inlined_call_operand.hbm [shape: f32[1,32], index: 3, kind: input, shape index: {}]
  %s4 = inlined_call_operand.hbm [shape: f32[1,32], index: 4, kind: input, shape index: {}]
  %s5 = inlined_call_operand.hbm [shape: f32[8,32], index: 5, kind: input, shape index: {}]
  %s6 = inlined_call_operand.hbm [shape: f32[1,32], index: 6, kind: input, shape index: {}]
  %s7 = inlined_call_operand.hbm [shape: f32[1,32], index: 7, kind: input, shape index: {}]
  %s8 = inlined_call_operand.hbm [shape: f32[1,32], index: 8, kind: input, shape index: {}]
  %s9 = inlined_call_operand.vmem [shape: bf16[32,96], index: 9, kind: input, shape index: {}]
  %s10 = inlined_call_operand.hbm [shape: bf16[32,32], index: 10, kind: input, shape index: {}]
  %s11 = inlined_call_operand.vmem [shape: f32[4], index: 11, kind: input, shape index: {}]
  %s12 = inlined_call_operand.hbm [shape: f32[2,8,32], index: 12, kind: output, shape index: {0}]
  %s13 = inlined_call_operand.vmem [shape: f32[2,9,32], index: 13, kind: output, shape index: {1}]
  %14 = xla_tuple %s12, %s13
  %s15 = sld [smem:[#allocation0]]
  $region141: #{tpu_custom_call.1} parent=0
    _
  %s17 = ssub.s32 1, %s15
  %s18 = scalar_select 0, %s17, %s15
  $region1: #{tpu_custom_call.1} parent=0
    #allocation6 [shape = 'u8[4096]{0}', space=vmem, size = 0x1000, scoped, tag = 'input window, operand 0']
    #allocation7 [shape = 's32[2]{0}', space=sflag, size = 0x8, scoped, tag = 'scoped memory for tpu_custom_call.1']
    #allocation8 [shape = 's32[2]{0}', space=sflag, size = 0x8, scoped, tag = 'scoped memory for tpu_custom_call.1']
    #allocation9 [shape = 's32[2]{0}', space=sflag, size = 0x8, scoped, tag = 'scoped memory for tpu_custom_call.1']
    #allocation10 [shape = 'u8[4096]{0}', space=vmem, size = 0x1000, scoped, tag = 'input window, operand 1, single buffered']
    #allocation11 [shape = 's32[1]{0}', space=sflag, size = 0x4, scoped, tag = 'scoped memory for tpu_custom_call.1']
    #allocation12 [shape = 'u8[512]{0}', space=vmem, size = 0x400, scoped, tag = 'input window, operand 2, single buffered']
    #allocation13 [shape = 'u8[512]{0}', space=vmem, size = 0x400, scoped, tag = 'input window, operand 3, single buffered']
    #allocation14 [shape = 's32[1]{0}', space=sflag, size = 0x4, scoped, tag = 'scoped memory for tpu_custom_call.1']
    #allocation15 [shape = 'u8[512]{0}', space=vmem, size = 0x400, scoped, tag = 'input window, operand 4, single buffered']
    #allocation16 [shape = 'u8[4096]{0}', space=vmem, size = 0x1000, scoped, tag = 'input window, operand 5, single buffered']
    #allocation17 [shape = 's32[1]{0}', space=sflag, size = 0x4, scoped, tag = 'scoped memory for tpu_custom_call.1']
    #allocation18 [shape = 'u8[512]{0}', space=vmem, size = 0x400, scoped, tag = 'input window, operand 6, single buffered']
    #allocation19 [shape = 'u8[512]{0}', space=vmem, size = 0x400, scoped, tag = 'input window, operand 7, single buffered']
    #allocation20 [shape = 's32[1]{0}', space=sflag, size = 0x4, scoped, tag = 'scoped memory for tpu_custom_call.1']
    #allocation21 [shape = 'u8[512]{0}', space=vmem, size = 0x400, scoped, tag = 'input window, operand 8, single buffered']
    #allocation22 [shape = 'u8[8192]{0}', space=vmem, size = 0x2000, scoped, tag = 'input window, operand 10, single buffered']
    #allocation23 [shape = 's32[1]{0}', space=sflag, size = 0x4, scoped, tag = 'scoped memory for tpu_custom_call.1']
    #allocation24 [shape = 'u8[512]{0}', space=smem, size = 0x200, scoped, tag = 'input window, operand 11, single buffered']
    #allocation25 [shape = 'u8[8192]{0}', space=vmem, size = 0x2000, scoped, tag = 'output window, operand 0']
    %19 = vsyncpa [#allocation7], 0
    %s20 = scalar_lea.sflag [#allocation7], 1
    %21 = vsyncpa %s20, 0
    %22 = vsyncpa [#allocation11], 0
    %23 = vsyncpa [#allocation14], 0
    %24 = vsyncpa [#allocation17], 0
    %25 = vsyncpa [#allocation20], 0
    %26 = vsyncpa [#allocation23], 0
    %27 = vsyncpa [#allocation9], 0
    %28 = vsyncpa [#allocation8], 0
    %s29 = scalar_lea.sflag [#allocation8], 1
    %30 = vsyncpa %s29, 0
    loop: start=0, step=1, limit=10
    $region2: #{tpu_custom_call.1} parent=1 // loop_pre_header
      _
    $region3: #{tpu_custom_call.1} parent=1 // loop_header
      %s32 = sphi 0, %s36
      %p33 = scmp.ge.s32.totalorder %s32, 10
      %s39 = sphi 0, %s51
      %s40 = sphi 0, %s47
      %s41 = sphi 0, %s39
      %s42 = sphi 0, %s40
      %s43 = sphi 0, %s41
      %s44 = sphi 0, %s42
      %s54 = sphi 0, %s56
      %s57 = sphi 0, %s54
      %s58 = sphi 0, %s57
      %s74 = sphi 0, %s58
      %s78 = sphi 0, %s78
      %s80 = sphi 0, %s78
      %s81 = sphi 0, %s80
      %s95 = sphi 0, %s81
      %s99 = sphi 0, %s99
      %s101 = sphi 0, %s99
      %s102 = sphi 0, %s101
      %s116 = sphi 0, %s102
      %s120 = sphi 0, %s120
      %s122 = sphi 0, %s120
      %s123 = sphi 0, %s122
      %s137 = sphi 0, %s123
      %s141 = sphi 0, %s141
      %s143 = sphi 0, %s141
      %s144 = sphi 0, %s143
      %s158 = sphi 0, %s144
      %s162 = sphi 0, %s162
      %s164 = sphi 0, %s162
      %s165 = sphi 0, %s164
      %s179 = sphi 0, %s165
      %s183 = sphi 0, %s183
      %s185 = sphi 0, %s183
      %s186 = sphi 0, %s185
      %s200 = sphi 0, %s186
      %s204 = sphi 0, %s204
      %s206 = sphi 0, %s204
      %s207 = sphi 0, %s206
      %s221 = sphi 0, %s207
      %s225 = sphi 0, %s225
      %s227 = sphi 0, %s225
      %s228 = sphi 0, %s227
      %s242 = sphi 0, %s228
      %s246 = sphi 0, %s246
      %s248 = sphi 0, %s246
      %s249 = sphi 0, %s248
      %s263 = sphi 0, %s249
      %s267 = sphi 0, %s267
      %s269 = sphi 0, %s267
      %s270 = sphi 0, %s269
      %s284 = sphi 0, %s270
      %s288 = sphi 0, %s288
      %s290 = sphi 0, %s288
      %s291 = sphi 0, %s290
      %s305 = sphi 0, %s291
      %s311 = sphi 0, %s313
      %s314 = sphi 0, %s311
      %s315 = sphi 0, %s314
      %s331 = sphi 0, %s315
      %s337 = sphi 0, %s339
      %s340 = sphi 0, %s337
      %s341 = sphi 0, %s340
      %s357 = sphi 0, %s341
    $region4: #{tpu_custom_call.1} parent=1 // loop_header_branch
      %35 = sbr.rel (%p33) target = $region8
    $region5: #{tpu_custom_call.1} parent=1 // loop_body
      %s37 = ssub.s32 %s32, 1
      %s38 = ssub.s32 %s32, 2
      %s45 = sadd.s32 1, %s40
      %p46 = scmp.ge.s32.totalorder %s45, 4
      %s47 = scalar_select %p46, 0, %s45
      %s48 = sadd.s32 1, %s39
      %s49 = scalar_select %p46, %s48, %s39
      %p50 = scmp.ge.s32.totalorder %s49, 2
      %s51 = scalar_select %p50, 0, %s49
      %s52 = ssub.s32 %s39, %s51
      %p53 = scmp.eq.s32.totalorder %s52, 0
      %s55 = sadd.s32 %s54, 1
      %s56 = scalar_select %p53, %s54, %s55
      %p59 = pneg %p53
      %p60 = scmp.eq.s32.totalorder %s32, 7
      %p61 = por %p59, %p60
      %p62 = scmp.ne.s32.totalorder %s54, %s57
      %p63 = scmp.eq.s32.totalorder %s32, 0
      %p64 = por %p62, %p63
      %p65 = scmp.ne.s32.totalorder %s54, %s57
      %p66 = scmp.eq.s32.totalorder %s37, 7
      %p67 = por %p65, %p66
      %p68 = scmp.ne.s32.totalorder %s57, %s58
      %p69 = scmp.eq.s32.totalorder %s37, 0
      %p70 = por %p68, %p69
      %p71 = scmp.ne.s32.totalorder %s57, %s58
      %p72 = scmp.eq.s32.totalorder %s38, 7
      %p73 = por %p71, %p72
      %p75 = scmp.ne.s32.totalorder %s58, %s74
      %p76 = scmp.eq.s32.totalorder %s38, 0
      %p77 = por %p75, %p76
      %s79 = sadd.s32 %s78, 1
      %p82 = scmp.eq.s32.totalorder %s32, 7
      %p83 = scmp.ne.s32.totalorder %s78, %s80
      %p84 = scmp.eq.s32.totalorder %s32, 0
      %p85 = por %p83, %p84
      %p86 = scmp.ne.s32.totalorder %s78, %s80
      %p87 = scmp.eq.s32.totalorder %s37, 7
      %p88 = por %p86, %p87
      %p89 = scmp.ne.s32.totalorder %s80, %s81
      %p90 = scmp.eq.s32.totalorder %s37, 0
      %p91 = por %p89, %p90
      %p92 = scmp.ne.s32.totalorder %s80, %s81
      %p93 = scmp.eq.s32.totalorder %s38, 7
      %p94 = por %p92, %p93
      %p96 = scmp.ne.s32.totalorder %s81, %s95
      %p97 = scmp.eq.s32.totalorder %s38, 0
      %p98 = por %p96, %p97
      %s100 = sadd.s32 %s99, 1
      %p103 = scmp.eq.s32.totalorder %s32, 7
      %p104 = scmp.ne.s32.totalorder %s99, %s101
      %p105 = scmp.eq.s32.totalorder %s32, 0
      %p106 = por %p104, %p105
      %p107 = scmp.ne.s32.totalorder %s99, %s101
      %p108 = scmp.eq.s32.totalorder %s37, 7
      %p109 = por %p107, %p108
      %p110 = scmp.ne.s32.totalorder %s101, %s102
      %p111 = scmp.eq.s32.totalorder %s37, 0
      %p112 = por %p110, %p111
      %p113 = scmp.ne.s32.totalorder %s101, %s102
      %p114 = scmp.eq.s32.totalorder %s38, 7
      %p115 = por %p113, %p114
      %p117 = scmp.ne.s32.totalorder %s102, %s116
      %p118 = scmp.eq.s32.totalorder %s38, 0
      %p119 = por %p117, %p118
      %s121 = sadd.s32 %s120, 1
      %p124 = scmp.eq.s32.totalorder %s32, 7
      %p125 = scmp.ne.s32.totalorder %s120, %s122
      %p126 = scmp.eq.s32.totalorder %s32, 0
      %p127 = por %p125, %p126
      %p128 = scmp.ne.s32.totalorder %s120, %s122
      %p129 = scmp.eq.s32.totalorder %s37, 7
      %p130 = por %p128, %p129
      %p131 = scmp.ne.s32.totalorder %s122, %s123
      %p132 = scmp.eq.s32.totalorder %s37, 0
      %p133 = por %p131, %p132
      %p134 = scmp.ne.s32.totalorder %s122, %s123
      %p135 = scmp.eq.s32.totalorder %s38, 7
      %p136 = por %p134, %p135
      %p138 = scmp.ne.s32.totalorder %s123, %s137
      %p139 = scmp.eq.s32.totalorder %s38, 0
      %p140 = por %p138, %p139
      %s142 = sadd.s32 %s141, 1
      %p145 = scmp.eq.s32.totalorder %s32, 7
      %p146 = scmp.ne.s32.totalorder %s141, %s143
      %p147 = scmp.eq.s32.totalorder %s32, 0
      %p148 = por %p146, %p147
      %p149 = scmp.ne.s32.totalorder %s141, %s143
      %p150 = scmp.eq.s32.totalorder %s37, 7
      %p151 = por %p149, %p150
      %p152 = scmp.ne.s32.totalorder %s143, %s144
      %p153 = scmp.eq.s32.totalorder %s37, 0
      %p154 = por %p152, %p153
      %p155 = scmp.ne.s32.totalorder %s143, %s144
      %p156 = scmp.eq.s32.totalorder %s38, 7
      %p157 = por %p155, %p156
      %p159 = scmp.ne.s32.totalorder %s144, %s158
      %p160 = scmp.eq.s32.totalorder %s38, 0
      %p161 = por %p159, %p160
      %s163 = sadd.s32 %s162, 1
      %p166 = scmp.eq.s32.totalorder %s32, 7
      %p167 = scmp.ne.s32.totalorder %s162, %s164
      %p168 = scmp.eq.s32.totalorder %s32, 0
      %p169 = por %p167, %p168
      %p170 = scmp.ne.s32.totalorder %s162, %s164
      %p171 = scmp.eq.s32.totalorder %s37, 7
      %p172 = por %p170, %p171
      %p173 = scmp.ne.s32.totalorder %s164, %s165
      %p174 = scmp.eq.s32.totalorder %s37, 0
      %p175 = por %p173, %p174
      %p176 = scmp.ne.s32.totalorder %s164, %s165
      %p177 = scmp.eq.s32.totalorder %s38, 7
      %p178 = por %p176, %p177
      %p180 = scmp.ne.s32.totalorder %s165, %s179
      %p181 = scmp.eq.s32.totalorder %s38, 0
      %p182 = por %p180, %p181
      %s184 = sadd.s32 %s183, 1
      %p187 = scmp.eq.s32.totalorder %s32, 7
      %p188 = scmp.ne.s32.totalorder %s183, %s185
      %p189 = scmp.eq.s32.totalorder %s32, 0
      %p190 = por %p188, %p189
      %p191 = scmp.ne.s32.totalorder %s183, %s185
      %p192 = scmp.eq.s32.totalorder %s37, 7
      %p193 = por %p191, %p192
      %p194 = scmp.ne.s32.totalorder %s185, %s186
      %p195 = scmp.eq.s32.totalorder %s37, 0
      %p196 = por %p194, %p195
      %p197 = scmp.ne.s32.totalorder %s185, %s186
      %p198 = scmp.eq.s32.totalorder %s38, 7
      %p199 = por %p197, %p198
      %p201 = scmp.ne.s32.totalorder %s186, %s200
      %p202 = scmp.eq.s32.totalorder %s38, 0
      %p203 = por %p201, %p202
      %s205 = sadd.s32 %s204, 1
      %p208 = scmp.eq.s32.totalorder %s32, 7
      %p209 = scmp.ne.s32.totalorder %s204, %s206
      %p210 = scmp.eq.s32.totalorder %s32, 0
      %p211 = por %p209, %p210
      %p212 = scmp.ne.s32.totalorder %s204, %s206
      %p213 = scmp.eq.s32.totalorder %s37, 7
      %p214 = por %p212, %p213
      %p215 = scmp.ne.s32.totalorder %s206, %s207
      %p216 = scmp.eq.s32.totalorder %s37, 0
      %p217 = por %p215, %p216
      %p218 = scmp.ne.s32.totalorder %s206, %s207
      %p219 = scmp.eq.s32.totalorder %s38, 7
      %p220 = por %p218, %p219
      %p222 = scmp.ne.s32.totalorder %s207, %s221
      %p223 = scmp.eq.s32.totalorder %s38, 0
      %p224 = por %p222, %p223
      %s226 = sadd.s32 %s225, 1
      %p229 = scmp.eq.s32.totalorder %s32, 7
      %p230 = scmp.ne.s32.totalorder %s225, %s227
      %p231 = scmp.eq.s32.totalorder %s32, 0
      %p232 = por %p230, %p231
      %p233 = scmp.ne.s32.totalorder %s225, %s227
      %p234 = scmp.eq.s32.totalorder %s37, 7
      %p235 = por %p233, %p234
      %p236 = scmp.ne.s32.totalorder %s227, %s228
      %p237 = scmp.eq.s32.totalorder %s37, 0
      %p238 = por %p236, %p237
      %p239 = scmp.ne.s32.totalorder %s227, %s228
      %p240 = scmp.eq.s32.totalorder %s38, 7
      %p241 = por %p239, %p240
      %p243 = scmp.ne.s32.totalorder %s228, %s242
      %p244 = scmp.eq.s32.totalorder %s38, 0
      %p245 = por %p243, %p244
      %s247 = sadd.s32 %s246, 1
      %p250 = scmp.eq.s32.totalorder %s32, 7
      %p251 = scmp.ne.s32.totalorder %s246, %s248
      %p252 = scmp.eq.s32.totalorder %s32, 0
      %p253 = por %p251, %p252
      %p254 = scmp.ne.s32.totalorder %s246, %s248
      %p255 = scmp.eq.s32.totalorder %s37, 7
      %p256 = por %p254, %p255
      %p257 = scmp.ne.s32.totalorder %s248, %s249
      %p258 = scmp.eq.s32.totalorder %s37, 0
      %p259 = por %p257, %p258
      %p260 = scmp.ne.s32.totalorder %s248, %s249
      %p261 = scmp.eq.s32.totalorder %s38, 7
      %p262 = por %p260, %p261
      %p264 = scmp.ne.s32.totalorder %s249, %s263
      %p265 = scmp.eq.s32.totalorder %s38, 0
      %p266 = por %p264, %p265
      %s268 = sadd.s32 %s267, 1
      %p271 = scmp.eq.s32.totalorder %s32, 7
      %p272 = scmp.ne.s32.totalorder %s267, %s269
      %p273 = scmp.eq.s32.totalorder %s32, 0
      %p274 = por %p272, %p273
      %p275 = scmp.ne.s32.totalorder %s267, %s269
      %p276 = scmp.eq.s32.totalorder %s37, 7
      %p277 = por %p275, %p276
      %p278 = scmp.ne.s32.totalorder %s269, %s270
      %p279 = scmp.eq.s32.totalorder %s37, 0
      %p280 = por %p278, %p279
      %p281 = scmp.ne.s32.totalorder %s269, %s270
      %p282 = scmp.eq.s32.totalorder %s38, 7
      %p283 = por %p281, %p282
      %p285 = scmp.ne.s32.totalorder %s270, %s284
      %p286 = scmp.eq.s32.totalorder %s38, 0
      %p287 = por %p285, %p286
      %s289 = sadd.s32 %s288, 1
      %p292 = scmp.eq.s32.totalorder %s32, 7
      %p293 = scmp.ne.s32.totalorder %s288, %s290
      %p294 = scmp.eq.s32.totalorder %s32, 0
      %p295 = por %p293, %p294
      %p296 = scmp.ne.s32.totalorder %s288, %s290
      %p297 = scmp.eq.s32.totalorder %s37, 7
      %p298 = por %p296, %p297
      %p299 = scmp.ne.s32.totalorder %s290, %s291
      %p300 = scmp.eq.s32.totalorder %s37, 0
      %p301 = por %p299, %p300
      %p302 = scmp.ne.s32.totalorder %s290, %s291
      %p303 = scmp.eq.s32.totalorder %s38, 7
      %p304 = por %p302, %p303
      %p306 = scmp.ne.s32.totalorder %s291, %s305
      %p307 = scmp.eq.s32.totalorder %s38, 0
      %p308 = por %p306, %p307
      %s309 = ssub.s32 %s39, %s51
      %p310 = scmp.eq.s32.totalorder %s309, 0
      %s312 = sadd.s32 %s311, 1
      %s313 = scalar_select %p310, %s311, %s312
      %p316 = pneg %p310
      %p317 = scmp.eq.s32.totalorder %s32, 7
      %p318 = por %p316, %p317
      %p319 = scmp.ne.s32.totalorder %s311, %s314
      %p320 = scmp.eq.s32.totalorder %s32, 0
      %p321 = por %p319, %p320
      %p322 = scmp.ne.s32.totalorder %s311, %s314
      %p323 = scmp.eq.s32.totalorder %s37, 7
      %p324 = por %p322, %p323
      %p325 = scmp.ne.s32.totalorder %s314, %s315
      %p326 = scmp.eq.s32.totalorder %s37, 0
      %p327 = por %p325, %p326
      %p328 = scmp.ne.s32.totalorder %s314, %s315
      %p329 = scmp.eq.s32.totalorder %s38, 7
      %p330 = por %p328, %p329
      %p332 = scmp.ne.s32.totalorder %s315, %s331
      %p333 = scmp.eq.s32.totalorder %s38, 0
      %p334 = por %p332, %p333
      %s335 = ssub.s32 %s39, %s51
      %p336 = scmp.eq.s32.totalorder %s335, 0
      %s338 = sadd.s32 %s337, 1
      %s339 = scalar_select %p336, %s337, %s338
      %p342 = pneg %p336
      %p343 = scmp.eq.s32.totalorder %s32, 7
      %p344 = por %p342, %p343
      %p345 = scmp.ne.s32.totalorder %s337, %s340
      %p346 = scmp.eq.s32.totalorder %s32, 0
      %p347 = por %p345, %p346
      %p348 = scmp.ne.s32.totalorder %s337, %s340
      %p349 = scmp.eq.s32.totalorder %s37, 7
      %p350 = por %p348, %p349
      %p351 = scmp.ne.s32.totalorder %s340, %s341
      %p352 = scmp.eq.s32.totalorder %s37, 0
      %p353 = por %p351, %p352
      %p354 = scmp.ne.s32.totalorder %s340, %s341
      %p355 = scmp.eq.s32.totalorder %s38, 7
      %p356 = por %p354, %p355
      %p358 = scmp.ne.s32.totalorder %s341, %s357
      %p359 = scmp.eq.s32.totalorder %s38, 0
      %p360 = por %p358, %p359
      %p361 = scmp.le.s32.totalorder 1, %s32
      %p362 = scmp.lt.s32.totalorder %s32, 9
      %p363 = pnand %p361, %p362
      %p364 = pneg %p363
      // Predicated region
      $region9: #{tpu_custom_call.1} parent=5 // pred_check
        _
      $region10: #{tpu_custom_call.1} parent=5 // pred_check_branch
        %366 = sbr.rel (%p363) target = $region12
      $region11: #{tpu_custom_call.1} parent=5 // pred_region
        %s367 = ssub.s32 %s32, 1
        // Predicated region
        $region13: #{tpu_custom_call.1} parent=11 // pred_check
          %p368 = pneg %p91
        $region14: #{tpu_custom_call.1} parent=11 // pred_check_branch
          %370 = sbr.rel (%p368) target = $region16
        $region15: #{tpu_custom_call.1} parent=11 // pred_region
          %s372 = ssub.s32 128, 128
          %373 = vsyncadd [#allocation11], %s372
          %s374 = sshll.u32 [#allocation10], 4
          %s375 = int_to_ptr.vmem [resolvable:$true] %s374
          %380 = dma.hbm_to_vmem [thread:$0]  %s1, 128, %s375, [#allocation11], 64, 64, 4
        $region16: #{tpu_custom_call.1} parent=11 // pred_fallthru
          _
        // Predicated region
        $region17: #{tpu_custom_call.1} parent=11 // pred_check
          %p381 = pneg %p112
        $region18: #{tpu_custom_call.1} parent=11 // pred_check_branch
          %383 = sbr.rel (%p381) target = $region20
        $region19: #{tpu_custom_call.1} parent=11 // pred_region
          %s385 = ssub.s32 16, 16
          %386 = vsyncadd [#allocation11], %s385
          %s388 = sshll.u32 [#allocation12], 4
          %s389 = int_to_ptr.vmem [resolvable:$true] %s388
          %391 = dma.hbm_to_vmem [thread:$0]  %s2, 16, %s389, [#allocation11]
        $region20: #{tpu_custom_call.1} parent=11 // pred_fallthru
          _
        // Predicated region
        $region21: #{tpu_custom_call.1} parent=11 // pred_check
          %p392 = pneg %p133
        $region22: #{tpu_custom_call.1} parent=11 // pred_check_branch
          %394 = sbr.rel (%p392) target = $region24
        $region23: #{tpu_custom_call.1} parent=11 // pred_region
          %s396 = ssub.s32 16, 16
          %397 = vsyncadd [#allocation14], %s396
          %s399 = sshll.u32 [#allocation13], 4
          %s400 = int_to_ptr.vmem [resolvable:$true] %s399
          %402 = dma.hbm_to_vmem [thread:$0]  %s3, 16, %s400, [#allocation14]
        $region24: #{tpu_custom_call.1} parent=11 // pred_fallthru
          _
        // Predicated region
        $region25: #{tpu_custom_call.1} parent=11 // pred_check
          %p403 = pneg %p154
        $region26: #{tpu_custom_call.1} parent=11 // pred_check_branch
          %405 = sbr.rel (%p403) target = $region28
        $region27: #{tpu_custom_call.1} parent=11 // pred_region
          %s407 = ssub.s32 16, 16
          %408 = vsyncadd [#allocation14], %s407
          %s410 = sshll.u32 [#allocation15], 4
          %s411 = int_to_ptr.vmem [resolvable:$true] %s410
          %413 = dma.hbm_to_vmem [thread:$0]  %s4, 16, %s411, [#allocation14]
        $region28: #{tpu_custom_call.1} parent=11 // pred_fallthru
          _
        // Predicated region
        $region29: #{tpu_custom_call.1} parent=11 // pred_check
          %p414 = pneg %p175
        $region30: #{tpu_custom_call.1} parent=11 // pred_check_branch
          %416 = sbr.rel (%p414) target = $region32
        $region31: #{tpu_custom_call.1} parent=11 // pred_region
          %s418 = ssub.s32 128, 128
          %419 = vsyncadd [#allocation17], %s418
          %s421 = sshll.u32 [#allocation16], 4
          %s422 = int_to_ptr.vmem [resolvable:$true] %s421
          %424 = dma.hbm_to_vmem [thread:$0]  %s5, 128, %s422, [#allocation17]
        $region32: #{tpu_custom_call.1} parent=11 // pred_fallthru
          _
        // Predicated region
        $region33: #{tpu_custom_call.1} parent=11 // pred_check
          %p425 = pneg %p196
        $region34: #{tpu_custom_call.1} parent=11 // pred_check_branch
          %427 = sbr.rel (%p425) target = $region36
        $region35: #{tpu_custom_call.1} parent=11 // pred_region
          %s429 = ssub.s32 16, 16
          %430 = vsyncadd [#allocation17], %s429
          %s432 = sshll.u32 [#allocation18], 4
          %s433 = int_to_ptr.vmem [resolvable:$true] %s432
          %435 = dma.hbm_to_vmem [thread:$0]  %s6, 16, %s433, [#allocation17]
        $region36: #{tpu_custom_call.1} parent=11 // pred_fallthru
          _
        // Predicated region
        $region37: #{tpu_custom_call.1} parent=11 // pred_check
          %p436 = pneg %p217
        $region38: #{tpu_custom_call.1} parent=11 // pred_check_branch
          %438 = sbr.rel (%p436) target = $region40
        $region39: #{tpu_custom_call.1} parent=11 // pred_region
          %s440 = ssub.s32 16, 16
          %441 = vsyncadd [#allocation20], %s440
          %s443 = sshll.u32 [#allocation19], 4
          %s444 = int_to_ptr.vmem [resolvable:$true] %s443
          %446 = dma.hbm_to_vmem [thread:$0]  %s7, 16, %s444, [#allocation20]
        $region40: #{tpu_custom_call.1} parent=11 // pred_fallthru
          _
        // Predicated region
        $region41: #{tpu_custom_call.1} parent=11 // pred_check
          %p447 = pneg %p238
        $region42: #{tpu_custom_call.1} parent=11 // pred_check_branch
          %449 = sbr.rel (%p447) target = $region44
        $region43: #{tpu_custom_call.1} parent=11 // pred_region
          %s451 = ssub.s32 16, 16
          %452 = vsyncadd [#allocation20], %s451
          %s454 = sshll.u32 [#allocation21], 4
          %s455 = int_to_ptr.vmem [resolvable:$true] %s454
          %457 = dma.hbm_to_vmem [thread:$0]  %s8, 16, %s455, [#allocation20]
        $region44: #{tpu_custom_call.1} parent=11 // pred_fallthru
          _
        // Predicated region
        $region45: #{tpu_custom_call.1} parent=11 // pred_check
          %p458 = pneg %p259
        $region46: #{tpu_custom_call.1} parent=11 // pred_check_branch
          %460 = sbr.rel (%p458) target = $region48
        $region47: #{tpu_custom_call.1} parent=11 // pred_region
          _
        $region48: #{tpu_custom_call.1} parent=11 // pred_fallthru
          _
        // Predicated region
        $region49: #{tpu_custom_call.1} parent=11 // pred_check
          %p461 = pneg %p280
        $region50: #{tpu_custom_call.1} parent=11 // pred_check_branch
          %463 = sbr.rel (%p461) target = $region52
        $region51: #{tpu_custom_call.1} parent=11 // pred_region
          %s465 = ssub.s32 256, 256
          %466 = vsyncadd [#allocation23], %s465
          %s467 = sshll.u32 [#allocation22], 4
          %s468 = int_to_ptr.vmem [resolvable:$true] %s467
          %473 = dma.hbm_to_vmem [thread:$0]  %s10, 256, %s468, [#allocation23], 64, 64, 4
        $region52: #{tpu_custom_call.1} parent=11 // pred_fallthru
          _
        // Predicated region
        $region53: #{tpu_custom_call.1} parent=11 // pred_check
          %p474 = pneg %p301
        $region54: #{tpu_custom_call.1} parent=11 // pred_check_branch
          %476 = sbr.rel (%p474) target = $region56
        $region55: #{tpu_custom_call.1} parent=11 // pred_region
          %s478 = ssub.s32 16, 16
          %479 = vsyncadd [#allocation9], %s478
          %s481 = sshll.u32 %s11, 4
          %s482 = int_to_ptr.vmem [resolvable:$true] %s481
          %484 = dma.vmem_to_smem %s482, 16, [#allocation24], [#allocation9]
        $region56: #{tpu_custom_call.1} parent=11 // pred_fallthru
          _
      $region12: #{tpu_custom_call.1} parent=5 // pred_fallthru
        _
      %p485 = scmp.lt.s32.totalorder %s32, 8
      // Predicated region
      $region57: #{tpu_custom_call.1} parent=5 // pred_check
        %p486 = pneg %p485
      $region58: #{tpu_custom_call.1} parent=5 // pred_check_branch
        %488 = sbr.rel (%p486) target = $region60
      $region59: #{tpu_custom_call.1} parent=5 // pred_region
        // Predicated region
        $region61: #{tpu_custom_call.1} parent=59 // pred_check
          %p489 = pneg %p64
        $region62: #{tpu_custom_call.1} parent=59 // pred_check_branch
          %491 = sbr.rel (%p489) target = $region64
        $region63: #{tpu_custom_call.1} parent=59 // pred_region
          %s492 = sand.u32 %s54, 1
          %s493 = scalar_lea.sflag [#allocation7], %s492
          %s494 = sand.u32 %s54, 1
          %s495 = smul.addr %s494, 4
          %s496 = scalar_lea.vmem [#allocation6], %s495
          %s498 = ssub.s32 64, 64
          %499 = vsyncadd %s493, %s498
          %s500 = smul.addr %s39, 64
          %s501 = scalar_lea.hbm %s0, %s500
          %s503 = sshll.u32 %s496, 4
          %s504 = int_to_ptr.vmem [resolvable:$true] %s503
          %506 = dma.hbm_to_vmem [thread:$0]  %s501, 64, %s504, %s493
        $region64: #{tpu_custom_call.1} parent=59 // pred_fallthru
          _
      $region60: #{tpu_custom_call.1} parent=5 // pred_fallthru
        _
      %p507 = scmp.le.s32.totalorder 1, %s32
      %p508 = scmp.lt.s32.totalorder %s32, 9
      %p509 = pnand %p507, %p508
      %p510 = pneg %p509
      // Predicated region
      $region65: #{tpu_custom_call.1} parent=5 // pred_check
        _
      $region66: #{tpu_custom_call.1} parent=5 // pred_check_branch
        %512 = sbr.rel (%p509) target = $region68
      $region67: #{tpu_custom_call.1} parent=5 // pred_region
        %s513 = ssub.s32 %s32, 1
        %s514 = sand.u32 %s57, 1
        %s515 = scalar_lea.sflag [#allocation7], %s514
        %s516 = sand.u32 %s57, 1
        %s517 = smul.addr %s516, 4
        %s518 = scalar_lea.vmem [#allocation6], %s517
        // Predicated region
        $region69: #{tpu_custom_call.1} parent=67 // pred_check
          %p519 = pneg %p70
        $region70: #{tpu_custom_call.1} parent=67 // pred_check_branch
          %521 = sbr.rel (%p519) target = $region72
        $region71: #{tpu_custom_call.1} parent=67 // pred_region
          %522 = dma.done %s515, 64
        $region72: #{tpu_custom_call.1} parent=67 // pred_fallthru
          _
        // Predicated region
        $region73: #{tpu_custom_call.1} parent=67 // pred_check
          %p523 = pneg %p91
        $region74: #{tpu_custom_call.1} parent=67 // pred_check_branch
          %525 = sbr.rel (%p523) target = $region76
        $region75: #{tpu_custom_call.1} parent=67 // pred_region
          %526 = dma.done [#allocation11], 128
        $region76: #{tpu_custom_call.1} parent=67 // pred_fallthru
          _
        // Predicated region
        $region77: #{tpu_custom_call.1} parent=67 // pred_check
          %p527 = pneg %p112
        $region78: #{tpu_custom_call.1} parent=67 // pred_check_branch
          %529 = sbr.rel (%p527) target = $region80
        $region79: #{tpu_custom_call.1} parent=67 // pred_region
          %530 = dma.done [#allocation11], 16
        $region80: #{tpu_custom_call.1} parent=67 // pred_fallthru
          _
        // Predicated region
        $region81: #{tpu_custom_call.1} parent=67 // pred_check
          %p531 = pneg %p133
        $region82: #{tpu_custom_call.1} parent=67 // pred_check_branch
          %533 = sbr.rel (%p531) target = $region84
        $region83: #{tpu_custom_call.1} parent=67 // pred_region
          %534 = dma.done [#allocation14], 16
        $region84: #{tpu_custom_call.1} parent=67 // pred_fallthru
          _
        // Predicated region
        $region85: #{tpu_custom_call.1} parent=67 // pred_check
          %p535 = pneg %p154
        $region86: #{tpu_custom_call.1} parent=67 // pred_check_branch
          %537 = sbr.rel (%p535) target = $region88
        $region87: #{tpu_custom_call.1} parent=67 // pred_region
          %538 = dma.done [#allocation14], 16
        $region88: #{tpu_custom_call.1} parent=67 // pred_fallthru
          _
        // Predicated region
        $region89: #{tpu_custom_call.1} parent=67 // pred_check
          %p539 = pneg %p175
        $region90: #{tpu_custom_call.1} parent=67 // pred_check_branch
          %541 = sbr.rel (%p539) target = $region92
        $region91: #{tpu_custom_call.1} parent=67 // pred_region
          %542 = dma.done [#allocation17], 128
        $region92: #{tpu_custom_call.1} parent=67 // pred_fallthru
          _
        // Predicated region
        $region93: #{tpu_custom_call.1} parent=67 // pred_check
          %p543 = pneg %p196
        $region94: #{tpu_custom_call.1} parent=67 // pred_check_branch
          %545 = sbr.rel (%p543) target = $region96
        $region95: #{tpu_custom_call.1} parent=67 // pred_region
          %546 = dma.done [#allocation17], 16
        $region96: #{tpu_custom_call.1} parent=67 // pred_fallthru
          _
        // Predicated region
        $region97: #{tpu_custom_call.1} parent=67 // pred_check
          %p547 = pneg %p217
        $region98: #{tpu_custom_call.1} parent=67 // pred_check_branch
          %549 = sbr.rel (%p547) target = $region100
        $region99: #{tpu_custom_call.1} parent=67 // pred_region
          %550 = dma.done [#allocation20], 16
        $region100: #{tpu_custom_call.1} parent=67 // pred_fallthru
          _
        // Predicated region
        $region101: #{tpu_custom_call.1} parent=67 // pred_check
          %p551 = pneg %p238
        $region102: #{tpu_custom_call.1} parent=67 // pred_check_branch
          %553 = sbr.rel (%p551) target = $region104
        $region103: #{tpu_custom_call.1} parent=67 // pred_region
          %554 = dma.done [#allocation20], 16
        $region104: #{tpu_custom_call.1} parent=67 // pred_fallthru
          _
        // Predicated region
        $region105: #{tpu_custom_call.1} parent=67 // pred_check
          %p555 = pneg %p280
        $region106: #{tpu_custom_call.1} parent=67 // pred_check_branch
          %557 = sbr.rel (%p555) target = $region108
        $region107: #{tpu_custom_call.1} parent=67 // pred_region
          %558 = dma.done [#allocation23], 256
        $region108: #{tpu_custom_call.1} parent=67 // pred_fallthru
          _
        // Predicated region
        $region109: #{tpu_custom_call.1} parent=67 // pred_check
          %p559 = pneg %p301
        $region110: #{tpu_custom_call.1} parent=67 // pred_check_branch
          %561 = sbr.rel (%p559) target = $region112
        $region111: #{tpu_custom_call.1} parent=67 // pred_region
          %562 = dma.done [#allocation9], 16
        $region112: #{tpu_custom_call.1} parent=67 // pred_fallthru
          _
        %563 = sfence
        %s564 = sand.u32 %s57, 1
        %s565 = scalar_lea.sflag [#allocation7], %s564
        %s566 = sand.u32 %s57, 1
        %s567 = smul.addr %s566, 4
        %s568 = scalar_lea.vmem [#allocation6], %s567
        %p569 = pneg %p70
        %p570 = pneg %p67
        %p571 = pneg %p91
        %p572 = pneg %p88
        %p573 = pneg %p112
        %p574 = pneg %p109
        %p575 = pneg %p133
        %p576 = pneg %p130
        %p577 = pneg %p154
        %p578 = pneg %p151
        %p579 = pneg %p175
        %p580 = pneg %p172
        %p581 = pneg %p196
        %p582 = pneg %p193
        %p583 = pneg %p217
        %p584 = pneg %p214
        %p585 = pneg %p238
        %p586 = pneg %p235
        %p587 = pneg %p259
        %p588 = pneg %p256
        %p589 = pneg %p280
        %p590 = pneg %p277
        %p591 = pneg %p301
        %p592 = pneg %p298
        %p593 = pneg %p327
        %p594 = pneg %p324
        %s595 = sand.u32 %s314, 1
        %s596 = scalar_lea.sflag [#allocation8], %s595
        %s597 = sand.u32 %s314, 1
        %s598 = smul.addr %s597, 8
        %s599 = scalar_lea.vmem [#allocation25], %s598
        %p600 = pneg %p353
        %p601 = pneg %p350
        %p602 = scmp.lt.s32.totalorder %s41, 1
        %s603 = scalar_select %p602, %s41, 1
        %s604 = smul.addr %s603, 2
        %s605 = smul.addr %s604, 8
        %s606 = scalar_lea.vmem %s13, %s605
        %p607 = scmp.lt.s32.totalorder %s41, 1
        %s608 = scalar_select %p607, %s41, 1
        %s609 = smul.addr %s608, 2
        %s610 = smul.addr %s609, 8
        %s611 = scalar_lea.vmem %s13, %s610
        %p613 = scmp.eq.s32.totalorder %s42, 0
        // Predicated region
        $region113: #{tpu_custom_call.1} parent=67 // pred_check
          %p614 = pneg %p613
        $region114: #{tpu_custom_call.1} parent=67 // pred_check_branch
          %616 = sbr.rel (%p614) target = $region116
        $region115: #{tpu_custom_call.1} parent=67 // pred_region
          %v617 = vld [vmem:[%s518] sm:$0xf]
          %v618 = vld [vmem:[#allocation10] sm:$0xf]
          %v619 = vld [vmem:[#allocation10 + $0x4] sm:$0xf]
          %v620 = vld [vmem:[#allocation12] sm:$0x1]
          %v622 = vlaneseq
          %v623 = vshrl.u32 %v622, 7
          %v624 = vsub.s32 0, %v623
          %v625 = vrot.slane %v620, %v624
          %v629 = vunpack.c.l.b16 %v618
          %v630 = vunpack.c.l.b16 %v619
          %v631 = vpack.c.b16 %v630, %v629
          %vm633 = vcmask 130048
          %v635 = vsel %vm633, %v617, 0
          %637 = vmatprep.subr.bf16.mxu0 0
          %638 = vmatpush1.bf16.msra.mxu0 0
          %639 = vmatprep.subr.bf16.mxu0 0
          %640 = vmatpush1.bf16.msra.mxu0 0
          %641 = vmatprep.subr.bf16.mxu0 0
          %642 = vmatpush1.bf16.msra.mxu0 0
          %643 = vmatprep.subr.bf16.mxu0 0
          %644 = vmatpush1.bf16.msra.mxu0 0
          %645 = vmatprep.subr.bf16.mxu0 0
          %646 = vmatpush1.bf16.msra.mxu0 0
          %647 = vmatprep.subr.bf16.mxu0 0
          %648 = vmatpush1.bf16.msra.mxu0 0
          %649 = vmatprep.subr.bf16.mxu0 0
          %650 = vmatpush1.bf16.msra.mxu0 0
          %651 = vmatprep.subr.bf16.mxu0 0
          %652 = vmatpush1.bf16.msra.mxu0 %v631
          %653 = vmatprep.subr.bf16.mxu0 0
          %654 = vmatpush2.bf16.msra.mxu0 0
          %655 = vmatprep.subr.bf16.mxu0 0
          %656 = vmatpush2.bf16.msra.mxu0 0
          %657 = vmatprep.subr.bf16.mxu0 0
          %658 = vmatpush2.bf16.msra.mxu0 0
          %659 = vmatprep.subr.bf16.mxu0 0
          %660 = vmatpush2.bf16.msra.mxu0 0
          %661 = vmatprep.subr.bf16.mxu0 0
          %662 = vmatpush2.bf16.msra.mxu0 0
          %663 = vmatprep.subr.bf16.mxu0 0
          %664 = vmatpush2.bf16.msra.mxu0 0
          %665 = vmatprep.subr.bf16.mxu0 0
          %666 = vmatpush2.bf16.msra.mxu0 0
          %667 = vmatprep.subr.bf16.mxu0 0
          %668 = vmatpush2.bf16.msra.mxu0 0
          %669 = vmatprep.mubr.bf16.mxu0 0
          %670 = vmatmul.mubr.bf16.gmra.mxu0 %v635
          %v671 = vpop.f32.mrf.mxu0
          %v672 = vadd.f32 %v625, %v671
          %v673 = vpop.f32.mrf.mxu0
          %v674 = vpop.f32.mrf.mxu0
          %v675 = vpop.f32.mrf.mxu0
          %676 = vdwg.mxu0
          %vm677 = vcmask 261120
          %v678 = vsel %vm677, %v672, 0.0
          %679 = vadd.xlane.f32.xlu0 %v678
          %v680 = vpop.xlane.xlu0 %679
          %v681 = vrcp.pop 32.0
          %v682 = vmul.f32 %v680, %v681
          %v683 = vsub.f32 %v672, %v682
          %v684 = vmul.f32 %v683, %v683
          %v685 = vsel %vm677, %v684, 0.0
          %686 = vadd.xlane.f32.xlu0 %v685
          %v687 = vpop.xlane.xlu0 %686
          %v688 = vmul.f32 %v687, %v681
          %v689 = vadd.f32 %v688, 1e-05
          %v690 = vrsqrt.pop %v689
          %v691 = vmul.f32 %v683, %v690
          %v692 = vld [vmem:[#allocation13] sm:$0x1]
          %v694 = vlaneseq
          %v695 = vshrl.u32 %v694, 7
          %v696 = vsub.s32 0, %v695
          %v697 = vrot.slane %v692, %v696
          %v699 = vmul.f32 %v691, %v697
          %v700 = vld [vmem:[#allocation15] sm:$0x1]
          %v702 = vlaneseq
          %v703 = vshrl.u32 %v702, 7
          %v704 = vsub.s32 0, %v703
          %v705 = vrot.slane %v700, %v704
          %v707 = vadd.f32 %v699, %v705
          %708 = vst.msk [vmem:[%s599] sm:$0xff] %vm677, %v707
          %v709 = vld [vmem:[#allocation18] sm:$0x1]
          %vm710 = vcmask 253952
          %711 = vst.msk [vmem:[#allocation2] sm:$0x1] %vm710, %v709
          %v712 = vld [vmem:[#allocation16] sm:$0xff]
          %v713 = vadd.f32 %v707, %v712
          %714 = vst.msk [vmem:[#allocation2 + $0x1] sm:$0xff] %vm677, %v713
          %vm715 = vcmask 260096
          %716 = vst.msk [vmem:[#allocation2 + $0x9] sm:$0x7f] %vm715, 0.0
          %v717 = vld [vmem:[#allocation2] sm:$0xff]
          %v718 = vld [vmem:[#allocation2 + $0x8] sm:$0xff]
          %v719 = vsel %vm677, %v717, 0.0
          %720 = vadd.xlane.f32.xlu0 %v719
          %v721 = vpop.xlane.xlu0 %720
          %v722 = vsel %vm677, %v718, 0.0
          %723 = vadd.xlane.f32.xlu0 %v722
          %v724 = vpop.xlane.xlu0 %723
          %v725 = vmul.f32 %v721, %v681
          %v726 = vmul.f32 %v724, %v681
          %v727 = vsub.f32 %v717, %v725
          %v728 = vsub.f32 %v718, %v726
          %v729 = vmul.f32 %v727, %v727
          %v730 = vmul.f32 %v728, %v728
          %v731 = vsel %vm677, %v729, 0.0
          %732 = vadd.xlane.f32.xlu0 %v731
          %v733 = vpop.xlane.xlu0 %732
          %v734 = vsel %vm677, %v730, 0.0
          %735 = vadd.xlane.f32.xlu0 %v734
          %v736 = vpop.xlane.xlu0 %735
          %v737 = vmul.f32 %v733, %v681
          %v738 = vmul.f32 %v736, %v681
          %v739 = vadd.f32 %v737, 1e-05
          %v740 = vadd.f32 %v738, 1e-05
          %v741 = vrsqrt.pop %v739
          %v742 = vrsqrt.pop %v740
          %v743 = vmul.f32 %v727, %v741
          %v744 = vmul.f32 %v728, %v742
          %v745 = vld [vmem:[#allocation19] sm:$0x1]
          %v747 = vlaneseq
          %v748 = vshrl.u32 %v747, 7
          %v749 = vsub.s32 0, %v748
          %v750 = vrot.slane %v745, %v749
          %v752 = vmul.f32 %v743, %v750
          %v753 = vmul.f32 %v744, %v750
          %v754 = vld [vmem:[#allocation21] sm:$0x1]
          %v756 = vlaneseq
          %v757 = vshrl.u32 %v756, 7
          %v758 = vsub.s32 0, %v757
          %v759 = vrot.slane %v754, %v758
          %v761 = vadd.f32 %v752, %v759
          %v762 = vadd.f32 %v753, %v759
          %v763 = vpack.c.bf16 %v762, %v761
          %v764 = vld [vmem:[%s9] sm:$0xf]
          %v765 = vld [vmem:[%s9 + $0x4] sm:$0xf]
          %v766 = vld [vmem:[%s9 + $0x8] sm:$0xf]
          %v767 = vld [vmem:[%s9 + $0xc] sm:$0xf]
          %v772 = vunpack.c.l.b16 %v764
          %v773 = vunpack.c.l.b16 %v765
          %v774 = vunpack.c.l.b16 %v766
          %v775 = vunpack.c.l.b16 %v767
          %v776 = vpack.c.b16 %v773, %v772
          %v777 = vpack.c.b16 %v775, %v774
          %v781 = vsel %vm677, %v763, 0
          %783 = vmatprep.subr.bf16.mxu0 0
          %784 = vmatpush1.bf16.msra.mxu0 0
          %785 = vmatprep.subr.bf16.mxu0 0
          %786 = vmatpush1.bf16.msra.mxu0 0
          %787 = vmatprep.subr.bf16.mxu0 0
          %788 = vmatpush1.bf16.msra.mxu0 0
          %789 = vmatprep.subr.bf16.mxu0 0
          %790 = vmatpush1.bf16.msra.mxu0 0
          %791 = vmatprep.subr.bf16.mxu0 0
          %792 = vmatpush1.bf16.msra.mxu0 0
          %793 = vmatprep.subr.bf16.mxu0 0
          %794 = vmatpush1.bf16.msra.mxu0 0
          %795 = vmatprep.subr.bf16.mxu0 0
          %796 = vmatpush1.bf16.msra.mxu0 %v777
          %797 = vmatprep.subr.bf16.mxu0 0
          %798 = vmatpush1.bf16.msra.mxu0 %v776
          %799 = vmatprep.subr.bf16.mxu0 0
          %800 = vmatpush2.bf16.msra.mxu0 0
          %801 = vmatprep.subr.bf16.mxu0 0
          %802 = vmatpush2.bf16.msra.mxu0 0
          %803 = vmatprep.subr.bf16.mxu0 0
          %804 = vmatpush2.bf16.msra.mxu0 0
          %805 = vmatprep.subr.bf16.mxu0 0
          %806 = vmatpush2.bf16.msra.mxu0 0
          %807 = vmatprep.subr.bf16.mxu0 0
          %808 = vmatpush2.bf16.msra.mxu0 0
          %809 = vmatprep.subr.bf16.mxu0 0
          %810 = vmatpush2.bf16.msra.mxu0 0
          %811 = vmatprep.subr.bf16.mxu0 0
          %812 = vmatpush2.bf16.msra.mxu0 0
          %813 = vmatprep.subr.bf16.mxu0 0
          %814 = vmatpush2.bf16.msra.mxu0 0
          %815 = vmatprep.mubr.bf16.mxu0 0
          %816 = vmatmul.mubr.bf16.gmra.mxu0 %v781
          %v817 = vpop.f32.mrf.mxu0
          %v818 = vadd.f32 0.0, %v817
          %v819 = vpop.f32.mrf.mxu0
          %v820 = vpop.f32.mrf.mxu0
          %v821 = vadd.f32 0.0, %v820
          %v822 = vpop.f32.mrf.mxu0
          %823 = vdwg.mxu0
          %v824 = vpack.c.bf16 %v821, %v818
          %v826 = vunpack.c.l.b16 %v824
          %v827 = vunpack.c.h.b16 %v824
          %v828 = vpack.c.b16 %v826, %v826
          %v829 = vpack.c.b16 %v827, %v827
          %vm832 = vcmask 191488
          %833 = vst.msk [vmem:[#allocation3] sm:$0xf] %vm832, %v828
          %834 = vst.msk [vmem:[#allocation3 + $0x4] sm:$0xf] %vm832, %v829
          %835 = vrot.lane.b32.xlu0 %v828, 104
          %v836 = vpop.permute.xlu0 %835
          %837 = vrot.lane.b32.xlu0 %v829, 104
          %v838 = vpop.permute.xlu0 %837
          %s841 = scalar_lea.vmem [#allocation3], 8
          %842 = vst.msk [vmem:[%s841] sm:$0xf] %vm832, %v836
          %843 = vst.msk [vmem:[%s841 + $0x4] sm:$0xf] %vm832, %v838
          %844 = vrot.lane.b32.xlu0 %v828, 80
          %v845 = vpop.permute.xlu0 %844
          %846 = vrot.lane.b32.xlu0 %v829, 80
          %v847 = vpop.permute.xlu0 %846
          %s850 = scalar_lea.vmem [#allocation3], 16
          %851 = vst.msk [vmem:[%s850] sm:$0xf] %vm832, %v845
          %852 = vst.msk [vmem:[%s850 + $0x4] sm:$0xf] %vm832, %v847
          %853 = vrot.lane.b32.xlu0 %v828, 56
          %v854 = vpop.permute.xlu0 %853
          %855 = vrot.lane.b32.xlu0 %v829, 56
          %v856 = vpop.permute.xlu0 %855
          %s859 = scalar_lea.vmem [#allocation3], 24
          %860 = vst.msk [vmem:[%s859] sm:$0xf] %vm832, %v854
          %861 = vst.msk [vmem:[%s859 + $0x4] sm:$0xf] %vm832, %v856
          %v862 = vlaneseq
          %v863 = vshrl.u32 %v862, 7
          %v864 = vadd.s32 %v863, 8
          %v865 = vlaneseq
          %v866 = vand.u32 %v865, 127
          %v867 = vsub.s32 %v863, %v866
          %v868 = vsub.s32 %v864, %v866
          %vm869 = vcmp.lt.s32.totalorder %v867, 0
          %v870 = vsub.s32 0, %v867
          %v871 = vsel %vm869, %v870, %v867
          %vm872 = vcmp.lt.s32.totalorder %v868, 0
          %v873 = vsub.s32 0, %v868
          %v874 = vsel %vm872, %v873, %v868
          %v875 = vcvt.s32.f32 %v871
          %v876 = vcvt.s32.f32 %v874
          %v877 = vsub.f32 0.0, %v875
          %v878 = vsub.f32 0.0, %v876
          %vm879 = vcmp.ge.s32.totalorder %v863, 1
          %vm880 = vcmp.ge.s32.totalorder %v864, 1
          %vm881 = vcmp.ge.s32.totalorder %v866, 1
          %vm882 = vmand %vm879, %vm881
          %vm883 = vmand %vm880, %vm881
          %vm884 = vcmp.lt.s32.totalorder %v863, 9
          %vm885 = vcmp.lt.s32.totalorder %v864, 9
          %vm886 = vcmp.lt.s32.totalorder %v866, 9
          %vm887 = vmand %vm884, %vm886
          %vm888 = vmand %vm885, %vm886
          %vm889 = vmand %vm882, %vm887
          %vm890 = vmand %vm883, %vm888
          %v891 = vsel %vm889, %v877, 0.0
          %v892 = vsel %vm890, %v878, 0.0
          %893 = vst.msk [vmem:[#allocation4] sm:$0xff] %vm633, %v891
          %894 = vst.msk [vmem:[#allocation4 + $0x8] sm:$0xff] %vm633, %v892
        $region116: #{tpu_custom_call.1} parent=67 // pred_fallthru
          _
        %s895 = smul.u32 %s42, 2
        %s896 = smul.addr %s895, 4
        %s897 = scalar_lea.vmem [#allocation3], %s896
        %v898 = vld [vmem:[%s897] sm:$0xf]
        %v899 = vld [vmem:[%s897 + $0x4] sm:$0xf]
        %v902 = vunpack.c.l.b16 %v898
        %v903 = vunpack.c.l.b16 %v899
        %v904 = vpack.c.b16 %v903, %v902
        %905 = vrot.lane.b32.xlu0 %v904, 120
        %v906 = vpop.permute.xlu0 %905
        %vm907 = vcmask 64512
        %v909 = vsel %vm907, %v904, 0
        %v912 = vsel %vm907, %v906, 0
        %914 = vmatprep.subr.bf16.mxu0 0
        %915 = vmatpush1.bf16.xpose.msra.mxu0 0
        %916 = vmatprep.subr.bf16.mxu0 0
        %917 = vmatpush1.bf16.xpose.msra.mxu0 0
        %918 = vmatprep.subr.bf16.mxu0 0
        %919 = vmatpush1.bf16.xpose.msra.mxu0 0
        %920 = vmatprep.subr.bf16.mxu0 0
        %921 = vmatpush1.bf16.xpose.msra.mxu0 0
        %922 = vmatprep.subr.bf16.mxu0 0
        %923 = vmatpush1.bf16.xpose.msra.mxu0 0
        %924 = vmatprep.subr.bf16.mxu0 0
        %925 = vmatpush1.bf16.xpose.msra.mxu0 0
        %926 = vmatprep.subr.bf16.mxu0 0
        %927 = vmatpush1.bf16.xpose.msra.mxu0 0
        %928 = vmatprep.subr.bf16.mxu0 0
        %929 = vmatpush1.bf16.xpose.msra.mxu0 %v912
        %930 = vmatprep.subr.bf16.mxu0 0
        %931 = vmatpush2.bf16.xpose.msra.mxu0 0
        %932 = vmatprep.subr.bf16.mxu0 0
        %933 = vmatpush2.bf16.xpose.msra.mxu0 0
        %934 = vmatprep.subr.bf16.mxu0 0
        %935 = vmatpush2.bf16.xpose.msra.mxu0 0
        %936 = vmatprep.subr.bf16.mxu0 0
        %937 = vmatpush2.bf16.xpose.msra.mxu0 0
        %938 = vmatprep.subr.bf16.mxu0 0
        %939 = vmatpush2.bf16.xpose.msra.mxu0 0
        %940 = vmatprep.subr.bf16.mxu0 0
        %941 = vmatpush2.bf16.xpose.msra.mxu0 0
        %942 = vmatprep.subr.bf16.mxu0 0
        %943 = vmatpush2.bf16.xpose.msra.mxu0 0
        %944 = vmatprep.subr.bf16.mxu0 0
        %945 = vmatpush2.bf16.xpose.msra.mxu0 0
        %946 = vmatprep.mubr.bf16.mxu0 0
        %947 = vmatmul.mubr.bf16.gmra.mxu0 %v909
        %v948 = vpop.f32.mrf.mxu0
        %v949 = vadd.f32 0.0, %v948
        %v950 = vpop.f32.mrf.mxu0
        %v951 = vpop.f32.mrf.mxu0
        %v952 = vadd.f32 0.0, %v951
        %v953 = vpop.f32.mrf.mxu0
        %954 = vdwg.mxu0
        %v955 = vmul.f32 %v949, 0.35355338
        %v956 = vmul.f32 %v952, 0.35355338
        %s957 = sld [smem:[#allocation24 + %s42]]
        %v958 = vld [vmem:[#allocation4] sm:$0xff]
        %v959 = vld [vmem:[#allocation4 + $0x8] sm:$0xff]
        %v960 = vstv %s957
        %v961 = vmul.f32 %v960, %v958
        %v962 = vmul.f32 %v960, %v959
        %v963 = vadd.f32 %v955, %v961
        %v964 = vadd.f32 %v956, %v962
        %v965 = vlaneseq
        %v966 = vand.u32 %v965, 127
        %vm967 = vcmp.lt.s32.totalorder %v966, 9
        %v968 = vsel %vm967, 0.0, -1e+30
        %v969 = vadd.f32 %v963, %v968
        %v970 = vadd.f32 %v964, %v968
        %vm971 = vcmask 130048
        %v972 = vsel %vm971, %v969, -inf
        %973 = vmax.xlane.f32.xlu0 %v972
        %v974 = vpop.xlane.xlu0 %973
        %v975 = vsel %vm971, %v970, -inf
        %976 = vmax.xlane.f32.xlu0 %v975
        %v977 = vpop.xlane.xlu0 %976
        %v978 = vsub.f32 %v969, %v974
        %v979 = vsub.f32 %v970, %v977
        %v980 = vmul.f32 %v978, 1.442695
        %v981 = vpow.pop %v980
        %v982 = vmul.f32 %v979, 1.442695
        %v983 = vpow.pop %v982
        %v984 = vsel %vm971, %v981, 0.0
        %985 = vadd.xlane.f32.xlu0 %v984
        %v986 = vpop.xlane.xlu0 %985
        %v987 = vsel %vm971, %v983, 0.0
        %988 = vadd.xlane.f32.xlu0 %v987
        %v989 = vpop.xlane.xlu0 %988
        %v990 = vrcp.pop %v986
        %v991 = vrcp.pop %v989
        %v992 = vmul.f32 %v981, %v990
        %v993 = vmul.f32 %v983, %v991
        %v994 = vpack.c.bf16 %v993, %v992
        %995 = vrot.lane.b32.xlu0 %v904, 112
        %v996 = vpop.permute.xlu0 %995
        %v999 = vsel %vm971, %v994, 0
        %1001 = vmatprep.subr.bf16.mxu0 0
        %1002 = vmatpush1.bf16.msra.mxu0 0
        %1003 = vmatprep.subr.bf16.mxu0 0
        %1004 = vmatpush1.bf16.msra.mxu0 0
        %1005 = vmatprep.subr.bf16.mxu0 0
        %1006 = vmatpush1.bf16.msra.mxu0 0
        %1007 = vmatprep.subr.bf16.mxu0 0
        %1008 = vmatpush1.bf16.msra.mxu0 0
        %1009 = vmatprep.subr.bf16.mxu0 0
        %1010 = vmatpush1.bf16.msra.mxu0 0
        %1011 = vmatprep.subr.bf16.mxu0 0
        %1012 = vmatpush1.bf16.msra.mxu0 0
        %1013 = vmatprep.subr.bf16.mxu0 0
        %1014 = vmatpush1.bf16.msra.mxu0 0
        %1015 = vmatprep.subr.bf16.mxu0 0
        %1016 = vmatpush1.bf16.msra.mxu0 %v996
        %1017 = vmatprep.subr.bf16.mxu0 0
        %1018 = vmatpush2.bf16.msra.mxu0 0
        %1019 = vmatprep.subr.bf16.mxu0 0
        %1020 = vmatpush2.bf16.msra.mxu0 0
        %1021 = vmatprep.subr.bf16.mxu0 0
        %1022 = vmatpush2.bf16.msra.mxu0 0
        %1023 = vmatprep.subr.bf16.mxu0 0
        %1024 = vmatpush2.bf16.msra.mxu0 0
        %1025 = vmatprep.subr.bf16.mxu0 0
        %1026 = vmatpush2.bf16.msra.mxu0 0
        %1027 = vmatprep.subr.bf16.mxu0 0
        %1028 = vmatpush2.bf16.msra.mxu0 0
        %1029 = vmatprep.subr.bf16.mxu0 0
        %1030 = vmatpush2.bf16.msra.mxu0 0
        %1031 = vmatprep.subr.bf16.mxu0 0
        %1032 = vmatpush2.bf16.msra.mxu0 0
        %1033 = vmatprep.mubr.bf16.mxu0 0
        %1034 = vmatmul.mubr.bf16.gmra.mxu0 %v999
        %v1035 = vpop.f32.mrf.mxu0
        %v1036 = vadd.f32 0.0, %v1035
        %v1037 = vpop.f32.mrf.mxu0
        %v1038 = vpop.f32.mrf.mxu0
        %v1039 = vadd.f32 0.0, %v1038
        %v1040 = vpop.f32.mrf.mxu0
        %1041 = vdwg.mxu0
        %v1042 = vpack.c.bf16 %v1039, %v1036
        %v1044 = vunpack.c.l.b16 %v1042
        %v1045 = vunpack.c.h.b16 %v1042
        %v1046 = vpack.c.b16 %v1044, %v1044
        %v1047 = vpack.c.b16 %v1045, %v1045
        %s1050 = smul.addr %s895, 4
        %s1051 = scalar_lea.vmem [#allocation5], %s1050
        %vm1052 = vcmask 60416
        %1053 = vst.msk [vmem:[%s1051] sm:$0xf] %vm1052, %v1046
        %1054 = vst.msk [vmem:[%s1051 + $0x4] sm:$0xf] %vm1052, %v1047
        %p1055 = scmp.eq.s32.totalorder %s42, 3
        // Predicated region
        $region117: #{tpu_custom_call.1} parent=67 // pred_check
          %p1056 = pneg %p1055
        $region118: #{tpu_custom_call.1} parent=67 // pred_check_branch
          %1058 = sbr.rel (%p1056) target = $region120
        $region119: #{tpu_custom_call.1} parent=67 // pred_region
          %v1059 = vld [vmem:[#allocation5] sm:$0xf]
          %v1060 = vld [vmem:[#allocation5 + $0x4] sm:$0xf]
          %s1061 = scalar_lea.vmem [#allocation5], 8
          %v1062 = vld [vmem:[%s1061] sm:$0xf]
          %v1063 = vld [vmem:[%s1061 + $0x4] sm:$0xf]
          %s1064 = scalar_lea.vmem [#allocation5], 16
          %v1065 = vld [vmem:[%s1064] sm:$0xf]
          %v1066 = vld [vmem:[%s1064 + $0x4] sm:$0xf]
          %s1067 = scalar_lea.vmem [#allocation5], 24
          %v1068 = vld [vmem:[%s1067] sm:$0xf]
          %v1069 = vld [vmem:[%s1067 + $0x4] sm:$0xf]
          %v1072 = vunpack.c.l.b16 %v1059
          %v1073 = vunpack.c.l.b16 %v1060
          %v1074 = vpack.c.b16 %v1073, %v1072
          %v1077 = vunpack.c.l.b16 %v1062
          %v1078 = vunpack.c.l.b16 %v1063
          %v1079 = vpack.c.b16 %v1078, %v1077
          %1080 = vrot.lane.b32.xlu0 %v1079, 8
          %v1081 = vpop.permute.xlu0 %1080
          %v1084 = vunpack.c.l.b16 %v1065
          %v1085 = vunpack.c.l.b16 %v1066
          %v1086 = vpack.c.b16 %v1085, %v1084
          %1087 = vrot.lane.b32.xlu0 %v1086, 16
          %v1088 = vpop.permute.xlu0 %1087
          %v1091 = vunpack.c.l.b16 %v1068
          %v1092 = vunpack.c.l.b16 %v1069
          %v1093 = vpack.c.b16 %v1092, %v1091
          %1094 = vrot.lane.b32.xlu0 %v1093, 24
          %v1095 = vpop.permute.xlu0 %1094
          %v1098 = vsel %vm907, %v1074, %v1081
          %v1100 = vsel %vm971, %v1098, %v1088
          %vm1101 = vcmask 195584
          %v1103 = vsel %vm1101, %v1100, %v1095
          %v1104 = vld [vmem:[#allocation22] sm:$0xf]
          %v1105 = vld [vmem:[#allocation22 + $0x4] sm:$0xf]
          %v1106 = vld [vmem:[#allocation22 + $0x8] sm:$0xf]
          %v1107 = vld [vmem:[#allocation22 + $0xc] sm:$0xf]
          %v1112 = vunpack.c.l.b16 %v1104
          %v1113 = vunpack.c.l.b16 %v1105
          %v1114 = vunpack.c.l.b16 %v1106
          %v1115 = vunpack.c.l.b16 %v1107
          %v1116 = vpack.c.b16 %v1113, %v1112
          %v1117 = vpack.c.b16 %v1115, %v1114
          %vm1120 = vcmask 261120
          %v1121 = vsel %vm1120, %v1103, 0
          %1123 = vmatprep.subr.bf16.mxu0 0
          %1124 = vmatpush1.bf16.msra.mxu0 0
          %1125 = vmatprep.subr.bf16.mxu0 0
          %1126 = vmatpush1.bf16.msra.mxu0 0
          %1127 = vmatprep.subr.bf16.mxu0 0
          %1128 = vmatpush1.bf16.msra.mxu0 0
          %1129 = vmatprep.subr.bf16.mxu0 0
          %1130 = vmatpush1.bf16.msra.mxu0 0
          %1131 = vmatprep.subr.bf16.mxu0 0
          %1132 = vmatpush1.bf16.msra.mxu0 0
          %1133 = vmatprep.subr.bf16.mxu0 0
          %1134 = vmatpush1.bf16.msra.mxu0 0
          %1135 = vmatprep.subr.bf16.mxu0 0
          %1136 = vmatpush1.bf16.msra.mxu0 %v1117
          %1137 = vmatprep.subr.bf16.mxu0 0
          %1138 = vmatpush1.bf16.msra.mxu0 %v1116
          %1139 = vmatprep.subr.bf16.mxu0 0
          %1140 = vmatpush2.bf16.msra.mxu0 0
          %1141 = vmatprep.subr.bf16.mxu0 0
          %1142 = vmatpush2.bf16.msra.mxu0 0
          %1143 = vmatprep.subr.bf16.mxu0 0
          %1144 = vmatpush2.bf16.msra.mxu0 0
          %1145 = vmatprep.subr.bf16.mxu0 0
          %1146 = vmatpush2.bf16.msra.mxu0 0
          %1147 = vmatprep.subr.bf16.mxu0 0
          %1148 = vmatpush2.bf16.msra.mxu0 0
          %1149 = vmatprep.subr.bf16.mxu0 0
          %1150 = vmatpush2.bf16.msra.mxu0 0
          %1151 = vmatprep.subr.bf16.mxu0 0
          %1152 = vmatpush2.bf16.msra.mxu0 0
          %1153 = vmatprep.subr.bf16.mxu0 0
          %1154 = vmatpush2.bf16.msra.mxu0 0
          %1155 = vmatprep.mubr.bf16.mxu0 0
          %1156 = vmatmul.mubr.bf16.gmra.mxu0 %v1121
          %v1157 = vpop.f32.mrf.mxu0
          %v1158 = vadd.f32 0.0, %v1157
          %v1159 = vpop.f32.mrf.mxu0
          %v1160 = vpop.f32.mrf.mxu0
          %v1161 = vadd.f32 0.0, %v1160
          %v1162 = vpop.f32.mrf.mxu0
          %1163 = vdwg.mxu0
          %v1164 = vld [vmem:[#allocation2] sm:$0xff]
          %v1165 = vld [vmem:[#allocation2 + $0x8] sm:$0x1]
          %v1166 = vadd.f32 %v1164, %v1158
          %v1167 = vadd.f32 %v1165, %v1161
          %1168 = vst.msk [vmem:[%s611] sm:$0xff] %vm1120, %v1166
          %vm1169 = vcmask 253952
          %1170 = vst.msk [vmem:[%s611 + $0x8] sm:$0x1] %vm1169, %v1167
        $region120: #{tpu_custom_call.1} parent=67 // pred_fallthru
          _
        %s1171 = sand.u32 %s314, 1
        %s1172 = scalar_lea.sflag [#allocation8], %s1171
        %s1173 = sand.u32 %s314, 1
        %s1174 = smul.addr %s1173, 8
        %s1175 = scalar_lea.vmem [#allocation25], %s1174
        %p1176 = scmp.lt.s32.totalorder %s41, 1
        %s1177 = scalar_select %p1176, %s41, 1
        %s1178 = smul.addr %s1177, 2
        %s1179 = smul.addr %s1178, 8
        %s1180 = scalar_lea.vmem %s13, %s1179
        // Predicated region
        $region121: #{tpu_custom_call.1} parent=67 // pred_check
          %p1181 = pneg %p324
        $region122: #{tpu_custom_call.1} parent=67 // pred_check_branch
          %1183 = sbr.rel (%p1181) target = $region124
        $region123: #{tpu_custom_call.1} parent=67 // pred_region
          %s1185 = ssub.s32 128, 128
          %1186 = vsyncadd %s1172, %s1185
          %s1187 = smul.addr %s41, 128
          %s1188 = scalar_lea.hbm %s12, %s1187
          %s1190 = sshll.u32 %s1175, 4
          %s1191 = int_to_ptr.vmem [resolvable:$true] %s1190
          %1193 = dma.vmem_to_hbm [thread:$0]  %s1191, 128, %s1188, %s1172
        $region124: #{tpu_custom_call.1} parent=67 // pred_fallthru
          _
        // Predicated region
        $region125: #{tpu_custom_call.1} parent=67 // pred_check
          %p1194 = pneg %p350
        $region126: #{tpu_custom_call.1} parent=67 // pred_check_branch
          %1196 = sbr.rel (%p1194) target = $region128
        $region127: #{tpu_custom_call.1} parent=67 // pred_region
          _
        $region128: #{tpu_custom_call.1} parent=67 // pred_fallthru
          _
      $region68: #{tpu_custom_call.1} parent=5 // pred_fallthru
        _
      %p1197 = scmp.le.s32.totalorder 2, %s32
      // Predicated region
      $region129: #{tpu_custom_call.1} parent=5 // pred_check
        %p1198 = pneg %p1197
      $region130: #{tpu_custom_call.1} parent=5 // pred_check_branch
        %1200 = sbr.rel (%p1198) target = $region132
      $region131: #{tpu_custom_call.1} parent=5 // pred_region
        %s1201 = ssub.s32 %s32, 2
        // Predicated region
        $region133: #{tpu_custom_call.1} parent=131 // pred_check
          %p1202 = pneg %p330
        $region134: #{tpu_custom_call.1} parent=131 // pred_check_branch
          %1204 = sbr.rel (%p1202) target = $region136
        $region135: #{tpu_custom_call.1} parent=131 // pred_region
          %s1205 = sand.u32 %s315, 1
          %s1206 = scalar_lea.sflag [#allocation8], %s1205
          %s1207 = sand.u32 %s315, 1
          %s1208 = smul.addr %s1207, 8
          %s1209 = scalar_lea.vmem [#allocation25], %s1208
          %1210 = dma.done %s1206, 128
        $region136: #{tpu_custom_call.1} parent=131 // pred_fallthru
          _
        // Predicated region
        $region137: #{tpu_custom_call.1} parent=131 // pred_check
          %p1211 = pneg %p356
        $region138: #{tpu_custom_call.1} parent=131 // pred_check_branch
          %1213 = sbr.rel (%p1211) target = $region140
        $region139: #{tpu_custom_call.1} parent=131 // pred_region
          %p1214 = scmp.lt.s32.totalorder %s43, 1
          %s1215 = scalar_select %p1214, %s43, 1
          %s1216 = smul.addr %s1215, 2
          %s1217 = smul.addr %s1216, 8
          %s1218 = scalar_lea.vmem %s13, %s1217
        $region140: #{tpu_custom_call.1} parent=131 // pred_fallthru
          _
      $region132: #{tpu_custom_call.1} parent=5 // pred_fallthru
        _
    $region6: #{tpu_custom_call.1} parent=1 // loop_footer
      %s36 = sadd.s32 1, %s32
    $region7: #{tpu_custom_call.1} parent=1 // loop_footer_branch
      %31 = sbr.rel target = $region3
    $region8: #{tpu_custom_call.1} parent=1 // loop_exit
      _
    %1219 = vsyncpa [#allocation7], 1
    %s1220 = scalar_lea.sflag [#allocation7], 1
    %1221 = vsyncpa %s1220, 1
    %1222 = vsyncpa [#allocation11], 1
    %1223 = vsyncpa [#allocation14], 1
    %1224 = vsyncpa [#allocation17], 1
    %1225 = vsyncpa [#allocation20], 1
    %1226 = vsyncpa [#allocation23], 1
    %1227 = vsyncpa [#allocation8], 1
    %s1228 = scalar_lea.sflag [#allocation8], 1
    %1229 = vsyncpa %s1228, 1
    %1230 = vsyncpa [#allocation9], 1
    %s1231 = scalar_lea.sflag [#allocation9], 1
    %1232 = vsyncpa %s1231, 1

</llo_original>
